<compile_context>
chip_gen: v7x
topology: tpu7x:2x2x1
jax: 0.10.0
libtpu: 0.0.40
codegen_flags: <defaults>
</compile_context>

<pallas_src>
import math

import jax
import jax.numpy as jnp
from jax import lax
from jax.experimental import pallas as pl

# ---- small, module-consistent config -----------------------------------------
B = 2             # batch
S = 8             # sequence length
H = 32            # config.hidden_size
NUM_HEADS = 4     # config.num_heads
HEAD_DIM = H // NUM_HEADS
# TODO(synk): the mask branch of forward (mask_626 / coeff_max boost of row 0 of
#             the scores) is not implemented; this kernel reproduces mask=None.
# TODO(synk): dropkey adds bernoulli(0.1) * -1e-12 to f32 scores in the PyTorch
#             source — a numerical no-op — so it is intentionally omitted here.


def _attention_kernel(x_ref, wqkv_ref, bqkv_ref, wo_ref, bo_ref,
                      out_ref, weights_ref, contrib_ref):
    x = x_ref[...]                                                    # (B*S, H)

    # Fused QKV projection: one MXU matmul instead of three tiny ones.
    qkv = jnp.dot(x, wqkv_ref[...],
                  preferred_element_type=jnp.float32) + bqkv_ref[...]  # (B*S, 3H)
    q = qkv[:, 0 * H:1 * H]
    k = qkv[:, 1 * H:2 * H]
    v = qkv[:, 2 * H:3 * H]

    scale = jnp.float32(1.0 / math.sqrt(HEAD_DIM))

    probs_rows = []     # per-batch (S, NH*S)
    ctx_rows = []       # per-batch (S, H)
    contrib_rows = []   # per-batch (S, NH)

    for b in range(B):                            # static loop (B = 2)
        r0 = b * S
        probs_cols = []
        ctx_cols = []
        col0_cols = []
        for h in range(NUM_HEADS):                # static loop (NH = 4)
            lo = h * HEAD_DIM
            qh = q[r0:r0 + S, lo:lo + HEAD_DIM]   # (S, hd)
            kh = k[r0:r0 + S, lo:lo + HEAD_DIM]
            vh = v[r0:r0 + S, lo:lo + HEAD_DIM]

            # attention_scores = q k^T / sqrt(hd); contract on the last dims so
            # no explicit kh.T transpose is materialized.
            scores = lax.dot_general(
                qh, kh, (((1,), (1,)), ((), ())),
                preferred_element_type=jnp.float32) * scale            # (S, S)

            # attention_probs = softmax(scores, dim=-1)
            m = jnp.max(scores, axis=-1, keepdims=True)
            e = jnp.exp(scores - m)
            probs = e / jnp.sum(e, axis=-1, keepdims=True)              # (S, S)
            probs_cols.append(probs)

            # column k = 0 of the scores, used for the dim=-2 softmax below
            col0_cols.append(scores[:, 0:1])                            # (S, 1)

            # per-head context
            ctx_cols.append(jnp.dot(probs, vh,
                                    preferred_element_type=jnp.float32))

        probs_rows.append(jnp.concatenate(probs_cols, axis=-1))        # (S, NH*S)
        ctx_rows.append(jnp.concatenate(ctx_cols, axis=-1))            # (S, H)

        # contribution = softmax(scores, dim=-2)[..., 0]; done for all heads at
        # once on the (S, NH) stack of k=0 columns.
        col0 = jnp.concatenate(col0_cols, axis=-1)                      # (S, NH)
        m2 = jnp.max(col0, axis=0, keepdims=True)
        e2 = jnp.exp(col0 - m2)
        contrib_rows.append(e2 / jnp.sum(e2, axis=0, keepdims=True))    # (S, NH)

    # Single lane-dense store per output (layout fix-up happens in the wrapper).
    weights_ref[...] = jnp.concatenate(probs_rows, axis=0)              # (B*S, NH*S)
    contrib_ref[...] = jnp.concatenate(contrib_rows, axis=0)            # (B*S, NH)

    # Output projection (proj_dropout is identity in eval mode).
    ctx = jnp.concatenate(ctx_rows, axis=0)                             # (B*S, H)
    out_ref[...] = jnp.dot(ctx, wo_ref[...],
                           preferred_element_type=jnp.float32) + bo_ref[...]


def attention_pallas(x, wq, bq, wk, bk, wv, bv, wo, bo):
    # Fuse the three projection weights/biases in the wrapper (free in XLA).
    wqkv = jnp.concatenate([wq, wk, wv], axis=1)       # (H, 3H)
    bqkv = jnp.concatenate([bq, bk, bv], axis=1)       # (1, 3H)
    x2d = x.reshape(B * S, H)                          # fold batch into rows

    out_flat, w_flat, c_flat = pl.pallas_call(
        _attention_kernel,
        out_shape=(
            jax.ShapeDtypeStruct((B * S, H), jnp.float32),              # output
            jax.ShapeDtypeStruct((B * S, NUM_HEADS * S), jnp.float32),  # weights (flat)
            jax.ShapeDtypeStruct((B * S, NUM_HEADS), jnp.float32),      # contribution (flat)
        ),
    )(x2d, wqkv, bqkv, wo, bo)

    out = out_flat.reshape(B, S, H)
    # w_flat[b*S + q, h*S + k] -> (B, NH, S, S)
    weights = w_flat.reshape(B, S, NUM_HEADS, S).transpose(0, 2, 1, 3)
    # c_flat[b*S + q, h] -> (B, NH, S)
    contribution = c_flat.reshape(B, S, NUM_HEADS).transpose(0, 2, 1)
    return out, weights, contribution


def attention_reference(x, wq, bq, wk, bk, wv, bv, wo, bo):
    """Pure-JAX reference (dropkey's -1e-12 perturbation is numerically negligible)."""
    q = x @ wq + bq
    k = x @ wk + bk
    v = x @ wv + bv

    def split_heads(t):
        return t.reshape(B, S, NUM_HEADS, HEAD_DIM).transpose(0, 2, 1, 3)

    qh, kh, vh = split_heads(q), split_heads(k), split_heads(v)
    scores = jnp.einsum('bhqd,bhkd->bhqk', qh, kh) / math.sqrt(HEAD_DIM)
    probs = jax.nn.softmax(scores, axis=-1)
    contrib = jax.nn.softmax(scores, axis=-2)[..., 0]
    ctx = jnp.einsum('bhqk,bhkd->bhqd', probs, vh)
    ctx = ctx.transpose(0, 2, 1, 3).reshape(B, S, H)
    out = ctx @ wo + bo
    return out, probs, contrib


if __name__ == "__main__":
    key = jax.random.PRNGKey(0)
    ks = jax.random.split(key, 9)

    x = jax.random.normal(ks[0], (B, S, H), dtype=jnp.float32)
    wq = jax.random.normal(ks[1], (H, H), dtype=jnp.float32) * 0.05
    wk = jax.random.normal(ks[2], (H, H), dtype=jnp.float32) * 0.05
    wv = jax.random.normal(ks[3], (H, H), dtype=jnp.float32) * 0.05
    wo = jax.random.normal(ks[4], (H, H), dtype=jnp.float32) * 0.05
    bq = jax.random.normal(ks[5], (1, H), dtype=jnp.float32) * 0.01
    bk = jax.random.normal(ks[6], (1, H), dtype=jnp.float32) * 0.01
    bv = jax.random.normal(ks[7], (1, H), dtype=jnp.float32) * 0.01
    bo = jax.random.normal(ks[8], (1, H), dtype=jnp.float32) * 0.01

    out, weights, contribution = attention_pallas(x, wq, bq, wk, bk, wv, bv, wo, bo)
    jax.block_until_ready((out, weights, contribution))

    ref_out, ref_w, ref_c = attention_reference(x, wq, bq, wk, bk, wv, bv, wo, bo)
    assert jnp.allclose(out, ref_out, atol=1e-4, rtol=1e-4), "attention_output mismatch"
    assert jnp.allclose(weights, ref_w, atol=1e-5, rtol=1e-4), "weights mismatch"
    assert jnp.allclose(contribution, ref_c, atol=1e-5, rtol=1e-4), "contribution mismatch"

    print("KERNEL_OK")
</pallas_src>

<mosaic_0001>
module attributes {stable_mosaic.version = 11 : i64} {
  func.func @_attention_kernel(%arg0: memref<16x32xf32, #tpu.memory_space<vmem>>, %arg1: memref<32x96xf32, #tpu.memory_space<vmem>>, %arg2: memref<1x96xf32, #tpu.memory_space<vmem>>, %arg3: memref<32x32xf32, #tpu.memory_space<vmem>>, %arg4: memref<1x32xf32, #tpu.memory_space<vmem>>, %arg5: memref<16x32xf32, #tpu.memory_space<vmem>>, %arg6: memref<16x32xf32, #tpu.memory_space<vmem>>, %arg7: memref<16x4xf32, #tpu.memory_space<vmem>>) attributes {dimension_semantics = [], scalar_prefetch = 0 : i64, scratch_operands = 0 : i64, tpu.core_type = #tpu.core_type<tc>} {
    %c0 = arith.constant 0 : index
    %c0_0 = arith.constant 0 : index
    %0 = vector.load %arg0[%c0, %c0_0] : memref<16x32xf32, #tpu.memory_space<vmem>>, vector<16x32xf32>
    %c0_1 = arith.constant 0 : index
    %c0_2 = arith.constant 0 : index
    %1 = vector.load %arg1[%c0_1, %c0_2] : memref<32x96xf32, #tpu.memory_space<vmem>>, vector<32x96xf32>
    %cst = arith.constant dense<0.000000e+00> : vector<16x96xf32>
    %2 = tpu.matmul %0, %1, %cst {dimension_numbers = #tpu.dot_dimension_numbers<[1], [0], [0], [1], [0, 0, 1, 1], [], []>} : vector<16x32xf32>, vector<32x96xf32>, vector<16x96xf32> -> vector<16x96xf32>
    %c0_3 = arith.constant 0 : index
    %c0_4 = arith.constant 0 : index
    %3 = vector.load %arg2[%c0_3, %c0_4] : memref<1x96xf32, #tpu.memory_space<vmem>>, vector<1x96xf32>
    %4 = vector.broadcast %3 : vector<1x96xf32> to vector<16x96xf32>
    %5 = arith.addf %2, %4 : vector<16x96xf32>
    %6 = vector.extract_strided_slice %5 {offsets = [0, 0], sizes = [16, 32], strides = [1, 1]} : vector<16x96xf32> to vector<16x32xf32>
    %7 = vector.extract_strided_slice %5 {offsets = [0, 32], sizes = [16, 32], strides = [1, 1]} : vector<16x96xf32> to vector<16x32xf32>
    %8 = vector.extract_strided_slice %5 {offsets = [0, 64], sizes = [16, 32], strides = [1, 1]} : vector<16x96xf32> to vector<16x32xf32>
    %9 = vector.extract_strided_slice %6 {offsets = [0, 0], sizes = [8, 8], strides = [1, 1]} : vector<16x32xf32> to vector<8x8xf32>
    %10 = vector.extract_strided_slice %7 {offsets = [0, 0], sizes = [8, 8], strides = [1, 1]} : vector<16x32xf32> to vector<8x8xf32>
    %11 = vector.extract_strided_slice %8 {offsets = [0, 0], sizes = [8, 8], strides = [1, 1]} : vector<16x32xf32> to vector<8x8xf32>
    %cst_5 = arith.constant dense<0.000000e+00> : vector<8x8xf32>
    %12 = tpu.matmul %9, %10, %cst_5 {dimension_numbers = #tpu.dot_dimension_numbers<[1], [1], [0], [0], [0, 0, 1, 0], [], []>} : vector<8x8xf32>, vector<8x8xf32>, vector<8x8xf32> -> vector<8x8xf32>
    %cst_6 = arith.constant 0.353553385 : f32
    %13 = vector.broadcast %cst_6 : f32 to vector<8x8xf32>
    %14 = arith.mulf %12, %13 : vector<8x8xf32>
    %cst_7 = arith.constant dense<0xFF800000> : vector<8xf32>
    %15 = vector.multi_reduction <maximumf>, %14, %cst_7 [1] : vector<8x8xf32> to vector<8xf32>
    %16 = vector.shape_cast %15 : vector<8xf32> to vector<8x1xf32>
    %17 = vector.broadcast %16 : vector<8x1xf32> to vector<8x8xf32>
    %18 = arith.subf %14, %17 : vector<8x8xf32>
    %19 = math.exp %18 : vector<8x8xf32>
    %cst_8 = arith.constant dense<0.000000e+00> : vector<8xf32>
    %20 = vector.multi_reduction <add>, %19, %cst_8 [1] : vector<8x8xf32> to vector<8xf32>
    %21 = vector.shape_cast %20 : vector<8xf32> to vector<8x1xf32>
    %22 = vector.broadcast %21 : vector<8x1xf32> to vector<8x8xf32>
    %23 = arith.divf %19, %22 : vector<8x8xf32>
    %24 = vector.extract_strided_slice %14 {offsets = [0, 0], sizes = [8, 1], strides = [1, 1]} : vector<8x8xf32> to vector<8x1xf32>
    %cst_9 = arith.constant dense<0.000000e+00> : vector<8x8xf32>
    %25 = tpu.matmul %23, %11, %cst_9 {dimension_numbers = #tpu.dot_dimension_numbers<[1], [0], [0], [1], [0, 0, 1, 1], [], []>} : vector<8x8xf32>, vector<8x8xf32>, vector<8x8xf32> -> vector<8x8xf32>
    %26 = vector.extract_strided_slice %6 {offsets = [0, 8], sizes = [8, 8], strides = [1, 1]} : vector<16x32xf32> to vector<8x8xf32>
    %27 = vector.extract_strided_slice %7 {offsets = [0, 8], sizes = [8, 8], strides = [1, 1]} : vector<16x32xf32> to vector<8x8xf32>
    %28 = vector.extract_strided_slice %8 {offsets = [0, 8], sizes = [8, 8], strides = [1, 1]} : vector<16x32xf32> to vector<8x8xf32>
    %cst_10 = arith.constant dense<0.000000e+00> : vector<8x8xf32>
    %29 = tpu.matmul %26, %27, %cst_10 {dimension_numbers = #tpu.dot_dimension_numbers<[1], [1], [0], [0], [0, 0, 1, 0], [], []>} : vector<8x8xf32>, vector<8x8xf32>, vector<8x8xf32> -> vector<8x8xf32>
    %cst_11 = arith.constant 0.353553385 : f32
    %30 = vector.broadcast %cst_11 : f32 to vector<8x8xf32>
    %31 = arith.mulf %29, %30 : vector<8x8xf32>
    %cst_12 = arith.constant dense<0xFF800000> : vector<8xf32>
    %32 = vector.multi_reduction <maximumf>, %31, %cst_12 [1] : vector<8x8xf32> to vector<8xf32>
    %33 = vector.shape_cast %32 : vector<8xf32> to vector<8x1xf32>
    %34 = vector.broadcast %33 : vector<8x1xf32> to vector<8x8xf32>
    %35 = arith.subf %31, %34 : vector<8x8xf32>
    %36 = math.exp %35 : vector<8x8xf32>
    %cst_13 = arith.constant dense<0.000000e+00> : vector<8xf32>
    %37 = vector.multi_reduction <add>, %36, %cst_13 [1] : vector<8x8xf32> to vector<8xf32>
    %38 = vector.shape_cast %37 : vector<8xf32> to vector<8x1xf32>
    %39 = vector.broadcast %38 : vector<8x1xf32> to vector<8x8xf32>
    %40 = arith.divf %36, %39 : vector<8x8xf32>
    %41 = vector.extract_strided_slice %31 {offsets = [0, 0], sizes = [8, 1], strides = [1, 1]} : vector<8x8xf32> to vector<8x1xf32>
    %cst_14 = arith.constant dense<0.000000e+00> : vector<8x8xf32>
    %42 = tpu.matmul %40, %28, %cst_14 {dimension_numbers = #tpu.dot_dimension_numbers<[1], [0], [0], [1], [0, 0, 1, 1], [], []>} : vector<8x8xf32>, vector<8x8xf32>, vector<8x8xf32> -> vector<8x8xf32>
    %43 = vector.extract_strided_slice %6 {offsets = [0, 16], sizes = [8, 8], strides = [1, 1]} : vector<16x32xf32> to vector<8x8xf32>
    %44 = vector.extract_strided_slice %7 {offsets = [0, 16], sizes = [8, 8], strides = [1, 1]} : vector<16x32xf32> to vector<8x8xf32>
    %45 = vector.extract_strided_slice %8 {offsets = [0, 16], sizes = [8, 8], strides = [1, 1]} : vector<16x32xf32> to vector<8x8xf32>
    %cst_15 = arith.constant dense<0.000000e+00> : vector<8x8xf32>
    %46 = tpu.matmul %43, %44, %cst_15 {dimension_numbers = #tpu.dot_dimension_numbers<[1], [1], [0], [0], [0, 0, 1, 0], [], []>} : vector<8x8xf32>, vector<8x8xf32>, vector<8x8xf32> -> vector<8x8xf32>
    %cst_16 = arith.constant 0.353553385 : f32
    %47 = vector.broadcast %cst_16 : f32 to vector<8x8xf32>
    %48 = arith.mulf %46, %47 : vector<8x8xf32>
    %cst_17 = arith.constant dense<0xFF800000> : vector<8xf32>
    %49 = vector.multi_reduction <maximumf>, %48, %cst_17 [1] : vector<8x8xf32> to vector<8xf32>
    %50 = vector.shape_cast %49 : vector<8xf32> to vector<8x1xf32>
    %51 = vector.broadcast %50 : vector<8x1xf32> to vector<8x8xf32>
    %52 = arith.subf %48, %51 : vector<8x8xf32>
    %53 = math.exp %52 : vector<8x8xf32>
    %cst_18 = arith.constant dense<0.000000e+00> : vector<8xf32>
    %54 = vector.multi_reduction <add>, %53, %cst_18 [1] : vector<8x8xf32> to vector<8xf32>
    %55 = vector.shape_cast %54 : vector<8xf32> to vector<8x1xf32>
    %56 = vector.broadcast %55 : vector<8x1xf32> to vector<8x8xf32>
    %57 = arith.divf %53, %56 : vector<8x8xf32>
    %58 = vector.extract_strided_slice %48 {offsets = [0, 0], sizes = [8, 1], strides = [1, 1]} : vector<8x8xf32> to vector<8x1xf32>
    %cst_19 = arith.constant dense<0.000000e+00> : vector<8x8xf32>
    %59 = tpu.matmul %57, %45, %cst_19 {dimension_numbers = #tpu.dot_dimension_numbers<[1], [0], [0], [1], [0, 0, 1, 1], [], []>} : vector<8x8xf32>, vector<8x8xf32>, vector<8x8xf32> -> vector<8x8xf32>
    %60 = vector.extract_strided_slice %6 {offsets = [0, 24], sizes = [8, 8], strides = [1, 1]} : vector<16x32xf32> to vector<8x8xf32>
    %61 = vector.extract_strided_slice %7 {offsets = [0, 24], sizes = [8, 8], strides = [1, 1]} : vector<16x32xf32> to vector<8x8xf32>
    %62 = vector.extract_strided_slice %8 {offsets = [0, 24], sizes = [8, 8], strides = [1, 1]} : vector<16x32xf32> to vector<8x8xf32>
    %cst_20 = arith.constant dense<0.000000e+00> : vector<8x8xf32>
    %63 = tpu.matmul %60, %61, %cst_20 {dimension_numbers = #tpu.dot_dimension_numbers<[1], [1], [0], [0], [0, 0, 1, 0], [], []>} : vector<8x8xf32>, vector<8x8xf32>, vector<8x8xf32> -> vector<8x8xf32>
    %cst_21 = arith.constant 0.353553385 : f32
    %64 = vector.broadcast %cst_21 : f32 to vector<8x8xf32>
    %65 = arith.mulf %63, %64 : vector<8x8xf32>
    %cst_22 = arith.constant dense<0xFF800000> : vector<8xf32>
    %66 = vector.multi_reduction <maximumf>, %65, %cst_22 [1] : vector<8x8xf32> to vector<8xf32>
    %67 = vector.shape_cast %66 : vector<8xf32> to vector<8x1xf32>
    %68 = vector.broadcast %67 : vector<8x1xf32> to vector<8x8xf32>
    %69 = arith.subf %65, %68 : vector<8x8xf32>
    %70 = math.exp %69 : vector<8x8xf32>
    %cst_23 = arith.constant dense<0.000000e+00> : vector<8xf32>
    %71 = vector.multi_reduction <add>, %70, %cst_23 [1] : vector<8x8xf32> to vector<8xf32>
    %72 = vector.shape_cast %71 : vector<8xf32> to vector<8x1xf32>
    %73 = vector.broadcast %72 : vector<8x1xf32> to vector<8x8xf32>
    %74 = arith.divf %70, %73 : vector<8x8xf32>
    %75 = vector.extract_strided_slice %65 {offsets = [0, 0], sizes = [8, 1], strides = [1, 1]} : vector<8x8xf32> to vector<8x1xf32>
    %cst_24 = arith.constant dense<0.000000e+00> : vector<8x8xf32>
    %76 = tpu.matmul %74, %62, %cst_24 {dimension_numbers = #tpu.dot_dimension_numbers<[1], [0], [0], [1], [0, 0, 1, 1], [], []>} : vector<8x8xf32>, vector<8x8xf32>, vector<8x8xf32> -> vector<8x8xf32>
    %77 = tpu.concatenate %23, %40, %57, %74 in 1 : vector<8x8xf32>, vector<8x8xf32>, vector<8x8xf32>, vector<8x8xf32> -> vector<8x32xf32>
    %78 = tpu.concatenate %25, %42, %59, %76 in 1 : vector<8x8xf32>, vector<8x8xf32>, vector<8x8xf32>, vector<8x8xf32> -> vector<8x32xf32>
    %79 = tpu.concatenate %24, %41, %58, %75 in 1 : vector<8x1xf32>, vector<8x1xf32>, vector<8x1xf32>, vector<8x1xf32> -> vector<8x4xf32>
    %cst_25 = arith.constant dense<0xFF800000> : vector<4xf32>
    %80 = vector.multi_reduction <maximumf>, %79, %cst_25 [0] : vector<8x4xf32> to vector<4xf32>
    %81 = vector.shape_cast %80 : vector<4xf32> to vector<1x4xf32>
    %82 = vector.broadcast %81 : vector<1x4xf32> to vector<8x4xf32>
    %83 = arith.subf %79, %82 : vector<8x4xf32>
    %84 = math.exp %83 : vector<8x4xf32>
    %cst_26 = arith.constant dense<0.000000e+00> : vector<4xf32>
    %85 = vector.multi_reduction <add>, %84, %cst_26 [0] : vector<8x4xf32> to vector<4xf32>
    %86 = vector.shape_cast %85 : vector<4xf32> to vector<1x4xf32>
    %87 = vector.broadcast %86 : vector<1x4xf32> to vector<8x4xf32>
    %88 = arith.divf %84, %87 : vector<8x4xf32>
    %89 = vector.extract_strided_slice %6 {offsets = [8, 0], sizes = [8, 8], strides = [1, 1]} : vector<16x32xf32> to vector<8x8xf32>
    %90 = vector.extract_strided_slice %7 {offsets = [8, 0], sizes = [8, 8], strides = [1, 1]} : vector<16x32xf32> to vector<8x8xf32>
    %91 = vector.extract_strided_slice %8 {offsets = [8, 0], sizes = [8, 8], strides = [1, 1]} : vector<16x32xf32> to vector<8x8xf32>
    %cst_27 = arith.constant dense<0.000000e+00> : vector<8x8xf32>
    %92 = tpu.matmul %89, %90, %cst_27 {dimension_numbers = #tpu.dot_dimension_numbers<[1], [1], [0], [0], [0, 0, 1, 0], [], []>} : vector<8x8xf32>, vector<8x8xf32>, vector<8x8xf32> -> vector<8x8xf32>
    %cst_28 = arith.constant 0.353553385 : f32
    %93 = vector.broadcast %cst_28 : f32 to vector<8x8xf32>
    %94 = arith.mulf %92, %93 : vector<8x8xf32>
    %cst_29 = arith.constant dense<0xFF800000> : vector<8xf32>
    %95 = vector.multi_reduction <maximumf>, %94, %cst_29 [1] : vector<8x8xf32> to vector<8xf32>
    %96 = vector.shape_cast %95 : vector<8xf32> to vector<8x1xf32>
    %97 = vector.broadcast %96 : vector<8x1xf32> to vector<8x8xf32>
    %98 = arith.subf %94, %97 : vector<8x8xf32>
    %99 = math.exp %98 : vector<8x8xf32>
    %cst_30 = arith.constant dense<0.000000e+00> : vector<8xf32>
    %100 = vector.multi_reduction <add>, %99, %cst_30 [1] : vector<8x8xf32> to vector<8xf32>
    %101 = vector.shape_cast %100 : vector<8xf32> to vector<8x1xf32>
    %102 = vector.broadcast %101 : vector<8x1xf32> to vector<8x8xf32>
    %103 = arith.divf %99, %102 : vector<8x8xf32>
    %104 = vector.extract_strided_slice %94 {offsets = [0, 0], sizes = [8, 1], strides = [1, 1]} : vector<8x8xf32> to vector<8x1xf32>
    %cst_31 = arith.constant dense<0.000000e+00> : vector<8x8xf32>
    %105 = tpu.matmul %103, %91, %cst_31 {dimension_numbers = #tpu.dot_dimension_numbers<[1], [0], [0], [1], [0, 0, 1, 1], [], []>} : vector<8x8xf32>, vector<8x8xf32>, vector<8x8xf32> -> vector<8x8xf32>
    %106 = vector.extract_strided_slice %6 {offsets = [8, 8], sizes = [8, 8], strides = [1, 1]} : vector<16x32xf32> to vector<8x8xf32>
    %107 = vector.extract_strided_slice %7 {offsets = [8, 8], sizes = [8, 8], strides = [1, 1]} : vector<16x32xf32> to vector<8x8xf32>
    %108 = vector.extract_strided_slice %8 {offsets = [8, 8], sizes = [8, 8], strides = [1, 1]} : vector<16x32xf32> to vector<8x8xf32>
    %cst_32 = arith.constant dense<0.000000e+00> : vector<8x8xf32>
    %109 = tpu.matmul %106, %107, %cst_32 {dimension_numbers = #tpu.dot_dimension_numbers<[1], [1], [0], [0], [0, 0, 1, 0], [], []>} : vector<8x8xf32>, vector<8x8xf32>, vector<8x8xf32> -> vector<8x8xf32>
    %cst_33 = arith.constant 0.353553385 : f32
    %110 = vector.broadcast %cst_33 : f32 to vector<8x8xf32>
    %111 = arith.mulf %109, %110 : vector<8x8xf32>
    %cst_34 = arith.constant dense<0xFF800000> : vector<8xf32>
    %112 = vector.multi_reduction <maximumf>, %111, %cst_34 [1] : vector<8x8xf32> to vector<8xf32>
    %113 = vector.shape_cast %112 : vector<8xf32> to vector<8x1xf32>
    %114 = vector.broadcast %113 : vector<8x1xf32> to vector<8x8xf32>
    %115 = arith.subf %111, %114 : vector<8x8xf32>
    %116 = math.exp %115 : vector<8x8xf32>
    %cst_35 = arith.constant dense<0.000000e+00> : vector<8xf32>
    %117 = vector.multi_reduction <add>, %116, %cst_35 [1] : vector<8x8xf32> to vector<8xf32>
    %118 = vector.shape_cast %117 : vector<8xf32> to vector<8x1xf32>
    %119 = vector.broadcast %118 : vector<8x1xf32> to vector<8x8xf32>
    %120 = arith.divf %116, %119 : vector<8x8xf32>
    %121 = vector.extract_strided_slice %111 {offsets = [0, 0], sizes = [8, 1], strides = [1, 1]} : vector<8x8xf32> to vector<8x1xf32>
    %cst_36 = arith.constant dense<0.000000e+00> : vector<8x8xf32>
    %122 = tpu.matmul %120, %108, %cst_36 {dimension_numbers = #tpu.dot_dimension_numbers<[1], [0], [0], [1], [0, 0, 1, 1], [], []>} : vector<8x8xf32>, vector<8x8xf32>, vector<8x8xf32> -> vector<8x8xf32>
    %123 = vector.extract_strided_slice %6 {offsets = [8, 16], sizes = [8, 8], strides = [1, 1]} : vector<16x32xf32> to vector<8x8xf32>
    %124 = vector.extract_strided_slice %7 {offsets = [8, 16], sizes = [8, 8], strides = [1, 1]} : vector<16x32xf32> to vector<8x8xf32>
    %125 = vector.extract_strided_slice %8 {offsets = [8, 16], sizes = [8, 8], strides = [1, 1]} : vector<16x32xf32> to vector<8x8xf32>
    %cst_37 = arith.constant dense<0.000000e+00> : vector<8x8xf32>
    %126 = tpu.matmul %123, %124, %cst_37 {dimension_numbers = #tpu.dot_dimension_numbers<[1], [1], [0], [0], [0, 0, 1, 0], [], []>} : vector<8x8xf32>, vector<8x8xf32>, vector<8x8xf32> -> vector<8x8xf32>
    %cst_38 = arith.constant 0.353553385 : f32
    %127 = vector.broadcast %cst_38 : f32 to vector<8x8xf32>
    %128 = arith.mulf %126, %127 : vector<8x8xf32>
    %cst_39 = arith.constant dense<0xFF800000> : vector<8xf32>
    %129 = vector.multi_reduction <maximumf>, %128, %cst_39 [1] : vector<8x8xf32> to vector<8xf32>
    %130 = vector.shape_cast %129 : vector<8xf32> to vector<8x1xf32>
    %131 = vector.broadcast %130 : vector<8x1xf32> to vector<8x8xf32>
    %132 = arith.subf %128, %131 : vector<8x8xf32>
    %133 = math.exp %132 : vector<8x8xf32>
    %cst_40 = arith.constant dense<0.000000e+00> : vector<8xf32>
    %134 = vector.multi_reduction <add>, %133, %cst_40 [1] : vector<8x8xf32> to vector<8xf32>
    %135 = vector.shape_cast %134 : vector<8xf32> to vector<8x1xf32>
    %136 = vector.broadcast %135 : vector<8x1xf32> to vector<8x8xf32>
    %137 = arith.divf %133, %136 : vector<8x8xf32>
    %138 = vector.extract_strided_slice %128 {offsets = [0, 0], sizes = [8, 1], strides = [1, 1]} : vector<8x8xf32> to vector<8x1xf32>
    %cst_41 = arith.constant dense<0.000000e+00> : vector<8x8xf32>
    %139 = tpu.matmul %137, %125, %cst_41 {dimension_numbers = #tpu.dot_dimension_numbers<[1], [0], [0], [1], [0, 0, 1, 1], [], []>} : vector<8x8xf32>, vector<8x8xf32>, vector<8x8xf32> -> vector<8x8xf32>
    %140 = vector.extract_strided_slice %6 {offsets = [8, 24], sizes = [8, 8], strides = [1, 1]} : vector<16x32xf32> to vector<8x8xf32>
    %141 = vector.extract_strided_slice %7 {offsets = [8, 24], sizes = [8, 8], strides = [1, 1]} : vector<16x32xf32> to vector<8x8xf32>
    %142 = vector.extract_strided_slice %8 {offsets = [8, 24], sizes = [8, 8], strides = [1, 1]} : vector<16x32xf32> to vector<8x8xf32>
    %cst_42 = arith.constant dense<0.000000e+00> : vector<8x8xf32>
    %143 = tpu.matmul %140, %141, %cst_42 {dimension_numbers = #tpu.dot_dimension_numbers<[1], [1], [0], [0], [0, 0, 1, 0], [], []>} : vector<8x8xf32>, vector<8x8xf32>, vector<8x8xf32> -> vector<8x8xf32>
    %cst_43 = arith.constant 0.353553385 : f32
    %144 = vector.broadcast %cst_43 : f32 to vector<8x8xf32>
    %145 = arith.mulf %143, %144 : vector<8x8xf32>
    %cst_44 = arith.constant dense<0xFF800000> : vector<8xf32>
    %146 = vector.multi_reduction <maximumf>, %145, %cst_44 [1] : vector<8x8xf32> to vector<8xf32>
    %147 = vector.shape_cast %146 : vector<8xf32> to vector<8x1xf32>
    %148 = vector.broadcast %147 : vector<8x1xf32> to vector<8x8xf32>
    %149 = arith.subf %145, %148 : vector<8x8xf32>
    %150 = math.exp %149 : vector<8x8xf32>
    %cst_45 = arith.constant dense<0.000000e+00> : vector<8xf32>
    %151 = vector.multi_reduction <add>, %150, %cst_45 [1] : vector<8x8xf32> to vector<8xf32>
    %152 = vector.shape_cast %151 : vector<8xf32> to vector<8x1xf32>
    %153 = vector.broadcast %152 : vector<8x1xf32> to vector<8x8xf32>
    %154 = arith.divf %150, %153 : vector<8x8xf32>
    %155 = vector.extract_strided_slice %145 {offsets = [0, 0], sizes = [8, 1], strides = [1, 1]} : vector<8x8xf32> to vector<8x1xf32>
    %cst_46 = arith.constant dense<0.000000e+00> : vector<8x8xf32>
    %156 = tpu.matmul %154, %142, %cst_46 {dimension_numbers = #tpu.dot_dimension_numbers<[1], [0], [0], [1], [0, 0, 1, 1], [], []>} : vector<8x8xf32>, vector<8x8xf32>, vector<8x8xf32> -> vector<8x8xf32>
    %157 = tpu.concatenate %103, %120, %137, %154 in 1 : vector<8x8xf32>, vector<8x8xf32>, vector<8x8xf32>, vector<8x8xf32> -> vector<8x32xf32>
    %158 = tpu.concatenate %105, %122, %139, %156 in 1 : vector<8x8xf32>, vector<8x8xf32>, vector<8x8xf32>, vector<8x8xf32> -> vector<8x32xf32>
    %159 = tpu.concatenate %104, %121, %138, %155 in 1 : vector<8x1xf32>, vector<8x1xf32>, vector<8x1xf32>, vector<8x1xf32> -> vector<8x4xf32>
    %cst_47 = arith.constant dense<0xFF800000> : vector<4xf32>
    %160 = vector.multi_reduction <maximumf>, %159, %cst_47 [0] : vector<8x4xf32> to vector<4xf32>
    %161 = vector.shape_cast %160 : vector<4xf32> to vector<1x4xf32>
    %162 = vector.broadcast %161 : vector<1x4xf32> to vector<8x4xf32>
    %163 = arith.subf %159, %162 : vector<8x4xf32>
    %164 = math.exp %163 : vector<8x4xf32>
    %cst_48 = arith.constant dense<0.000000e+00> : vector<4xf32>
    %165 = vector.multi_reduction <add>, %164, %cst_48 [0] : vector<8x4xf32> to vector<4xf32>
    %166 = vector.shape_cast %165 : vector<4xf32> to vector<1x4xf32>
    %167 = vector.broadcast %166 : vector<1x4xf32> to vector<8x4xf32>
    %168 = arith.divf %164, %167 : vector<8x4xf32>
    %169 = tpu.concatenate %77, %157 in 0 : vector<8x32xf32>, vector<8x32xf32> -> vector<16x32xf32>
    %c0_49 = arith.constant 0 : index
    %c0_50 = arith.constant 0 : index
    %170 = vector.load %arg6[%c0_49, %c0_50] : memref<16x32xf32, #tpu.memory_space<vmem>>, vector<16x32xf32>
    tpu.vector_store %arg6[%c0_49, %c0_50], %169 {strides = array<i32>} : memref<16x32xf32, #tpu.memory_space<vmem>>, vector<16x32xf32>,
    %171 = tpu.concatenate %88, %168 in 0 : vector<8x4xf32>, vector<8x4xf32> -> vector<16x4xf32>
    %c0_51 = arith.constant 0 : index
    %c0_52 = arith.constant 0 : index
    %172 = vector.load %arg7[%c0_51, %c0_52] : memref<16x4xf32, #tpu.memory_space<vmem>>, vector<16x4xf32>
    tpu.vector_store %arg7[%c0_51, %c0_52], %171 {strides = array<i32>} : memref<16x4xf32, #tpu.memory_space<vmem>>, vector<16x4xf32>,
    %173 = tpu.concatenate %78, %158 in 0 : vector<8x32xf32>, vector<8x32xf32> -> vector<16x32xf32>
    %c0_53 = arith.constant 0 : index
    %c0_54 = arith.constant 0 : index
    %174 = vector.load %arg3[%c0_53, %c0_54] : memref<32x32xf32, #tpu.memory_space<vmem>>, vector<32x32xf32>
    %cst_55 = arith.constant dense<0.000000e+00> : vector<16x32xf32>
    %175 = tpu.matmul %173, %174, %cst_55 {dimension_numbers = #tpu.dot_dimension_numbers<[1], [0], [0], [1], [0, 0, 1, 1], [], []>} : vector<16x32xf32>, vector<32x32xf32>, vector<16x32xf32> -> vector<16x32xf32>
    %c0_56 = arith.constant 0 : index
    %c0_57 = arith.constant 0 : index
    %176 = vector.load %arg4[%c0_56, %c0_57] : memref<1x32xf32, #tpu.memory_space<vmem>>, vector<1x32xf32>
    %177 = vector.broadcast %176 : vector<1x32xf32> to vector<16x32xf32>
    %178 = arith.addf %175, %177 : vector<16x32xf32>
    %c0_58 = arith.constant 0 : index
    %c0_59 = arith.constant 0 : index
    %179 = vector.load %arg5[%c0_58, %c0_59] : memref<16x32xf32, #tpu.memory_space<vmem>>, vector<16x32xf32>
    tpu.vector_store %arg5[%c0_58, %c0_59], %178 {strides = array<i32>} : memref<16x32xf32, #tpu.memory_space<vmem>>, vector<16x32xf32>,
    return
  }
}

</mosaic_0001>

<llo_original>
// kernel: tpu_custom_call.1
$region0: #{tpu_custom_call.1}
  #allocation0 [shape = 'u32[]', space=smem, size = 0x4, offset = 0x4, fixed_abs, tag = 'smem constant byte address 0x4 - core index']
  #allocation1 [shape = 'u32[144,128]{1,0:T(1,128)}', space=vmem, size = 0x12000, scoped, tag = 'internal scratch']
  %s0 = inlined_call_operand.hbm [shape: f32[16,32], index: 0, kind: input, shape index: {}]
  %s1 = inlined_call_operand.hbm [shape: f32[32,96], index: 1, kind: input, shape index: {}]
  %s2 = inlined_call_operand.vmem [shape: f32[1,96], index: 2, kind: input, shape index: {}]
  %s3 = inlined_call_operand.hbm [shape: f32[32,32], index: 3, kind: input, shape index: {}]
  %s4 = inlined_call_operand.vmem [shape: f32[1,32], index: 4, kind: input, shape index: {}]
  %s5 = inlined_call_operand.hbm [shape: f32[16,32], index: 5, kind: output, shape index: {0}]
  %s6 = inlined_call_operand.hbm [shape: f32[16,32], index: 6, kind: output, shape index: {1}]
  %s7 = inlined_call_operand.vmem [shape: f32[16,4], index: 7, kind: output, shape index: {2}]
  %8 = xla_tuple %s5, %s6, %s7
  %s9 = sld [smem:[#allocation0]]
  $region58: #{tpu_custom_call.1} parent=0
    _
  %s11 = ssub.s32 1, %s9
  %s12 = scalar_select 0, %s11, %s9
  $region1: #{tpu_custom_call.1} parent=0
    #allocation2 [shape = 'u8[8192]{0}', space=vmem, size = 0x2000, scoped, tag = 'input window, operand 0, single buffered']
    #allocation3 [shape = 's32[1]{0}', space=sflag, size = 0x4, scoped, tag = 'scoped memory for tpu_custom_call.1']
    #allocation4 [shape = 's32[1]{0}', space=sflag, size = 0x4, scoped, tag = 'scoped memory for tpu_custom_call.1']
    #allocation5 [shape = 'u8[16384]{0}', space=vmem, size = 0x4000, scoped, tag = 'input window, operand 1, single buffered']
    #allocation6 [shape = 's32[1]{0}', space=sflag, size = 0x4, scoped, tag = 'scoped memory for tpu_custom_call.1']
    #allocation7 [shape = 'u8[16384]{0}', space=vmem, size = 0x4000, scoped, tag = 'input window, operand 3, single buffered']
    #allocation8 [shape = 'u8[8192]{0}', space=vmem, size = 0x2000, scoped, tag = 'output window, operand 0, single buffered']
    #allocation9 [shape = 'u8[8192]{0}', space=vmem, size = 0x2000, scoped, tag = 'output window, operand 1, single buffered']
    #allocation10 [shape = 's32[1]{0}', space=sflag, size = 0x4, scoped, tag = 'scoped memory for tpu_custom_call.1']
    %13 = vsyncpa [#allocation3], 0
    %14 = vsyncpa [#allocation6], 0
    %15 = vsyncpa [#allocation4], 0
    %16 = vsyncpa [#allocation10], 0
    // Predicated region
    $region2: #{tpu_custom_call.1} parent=1 // pred_check
      _
    $region3: #{tpu_custom_call.1} parent=1 // pred_check_branch
      %18 = sbr.rel (0) target = $region5
    $region4: #{tpu_custom_call.1} parent=1 // pred_region
      %s20 = ssub.s32 256, 256
      %21 = vsyncadd [#allocation3], %s20
      %s22 = sshll.u32 [#allocation2], 4
      %s23 = int_to_ptr.vmem [resolvable:$true] %s22
      %28 = dma.hbm_to_vmem [thread:$0]  %s0, 256, %s23, [#allocation3], 128, 128, 8
    $region5: #{tpu_custom_call.1} parent=1 // pred_fallthru
      _
    // Predicated region
    $region6: #{tpu_custom_call.1} parent=1 // pred_check
      _
    $region7: #{tpu_custom_call.1} parent=1 // pred_check_branch
      %30 = sbr.rel (0) target = $region9
    $region8: #{tpu_custom_call.1} parent=1 // pred_region
      %s32 = ssub.s32 512, 512
      %33 = vsyncadd [#allocation6], %s32
      %s34 = sshll.u32 [#allocation5], 4
      %s35 = int_to_ptr.vmem [resolvable:$true] %s34
      %40 = dma.hbm_to_vmem [thread:$0]  %s1, 512, %s35, [#allocation6], 128, 128, 8
    $region9: #{tpu_custom_call.1} parent=1 // pred_fallthru
      _
    // Predicated region
    $region10: #{tpu_custom_call.1} parent=1 // pred_check
      _
    $region11: #{tpu_custom_call.1} parent=1 // pred_check_branch
      %42 = sbr.rel (0) target = $region13
    $region12: #{tpu_custom_call.1} parent=1 // pred_region
      _
    $region13: #{tpu_custom_call.1} parent=1 // pred_fallthru
      _
    // Predicated region
    $region14: #{tpu_custom_call.1} parent=1 // pred_check
      _
    $region15: #{tpu_custom_call.1} parent=1 // pred_check_branch
      %44 = sbr.rel (0) target = $region17
    $region16: #{tpu_custom_call.1} parent=1 // pred_region
      %s46 = ssub.s32 512, 512
      %47 = vsyncadd [#allocation6], %s46
      %s48 = sshll.u32 [#allocation7], 4
      %s49 = int_to_ptr.vmem [resolvable:$true] %s48
      %54 = dma.hbm_to_vmem [thread:$0]  %s3, 512, %s49, [#allocation6], 128, 128, 8
    $region17: #{tpu_custom_call.1} parent=1 // pred_fallthru
      _
    // Predicated region
    $region18: #{tpu_custom_call.1} parent=1 // pred_check
      _
    $region19: #{tpu_custom_call.1} parent=1 // pred_check_branch
      %56 = sbr.rel (0) target = $region21
    $region20: #{tpu_custom_call.1} parent=1 // pred_region
      _
    $region21: #{tpu_custom_call.1} parent=1 // pred_fallthru
      _
    // Predicated region
    $region22: #{tpu_custom_call.1} parent=1 // pred_check
      _
    $region23: #{tpu_custom_call.1} parent=1 // pred_check_branch
      %58 = sbr.rel (0) target = $region25
    $region24: #{tpu_custom_call.1} parent=1 // pred_region
      %59 = dma.done [#allocation3], 256
    $region25: #{tpu_custom_call.1} parent=1 // pred_fallthru
      _
    // Predicated region
    $region26: #{tpu_custom_call.1} parent=1 // pred_check
      _
    $region27: #{tpu_custom_call.1} parent=1 // pred_check_branch
      %61 = sbr.rel (0) target = $region29
    $region28: #{tpu_custom_call.1} parent=1 // pred_region
      %62 = dma.done [#allocation6], 512
    $region29: #{tpu_custom_call.1} parent=1 // pred_fallthru
      _
    // Predicated region
    $region30: #{tpu_custom_call.1} parent=1 // pred_check
      _
    $region31: #{tpu_custom_call.1} parent=1 // pred_check_branch
      %64 = sbr.rel (0) target = $region33
    $region32: #{tpu_custom_call.1} parent=1 // pred_region
      %65 = dma.done [#allocation6], 512
    $region33: #{tpu_custom_call.1} parent=1 // pred_fallthru
      _
    %v66 = vld [vmem:[#allocation2] sm:$0xff]
    %v67 = vld [vmem:[#allocation2 + $0x8] sm:$0xff]
    %v68 = vld [vmem:[#allocation5] sm:$0xff]
    %v69 = vld [vmem:[#allocation5 + $0x8] sm:$0xff]
    %v70 = vld [vmem:[#allocation5 + $0x10] sm:$0xff]
    %v71 = vld [vmem:[#allocation5 + $0x18] sm:$0xff]
    %v72 = vld [vmem:[%s2] sm:$0x1]
    %v74 = vlaneseq
    %v75 = vshrl.u32 %v74, 7
    %v76 = vsub.s32 0, %v75
    %v77 = vrot.slane %v72, %v76
    %vm79 = vcmask 261120
    %v81 = vsel %vm79, %v66, 0
    %v84 = vsel %vm79, %v67, 0
    %86 = vmatprep.subr.mxu0 0.0
    %87 = vmatpush1.msra.mxu0 %v68
    %88 = vmatprep.subr.mxu0 0.0
    %89 = vmatpush1.msra.mxu0 %v69
    %90 = vmatprep.subr.mxu0 0.0
    %91 = vmatpush1.msra.mxu0 %v70
    %92 = vmatprep.subr.mxu0 0.0
    %93 = vmatpush1.msra.mxu0 %v71
    %94 = vmatprep.subr.mxu0 0.0
    %95 = vmatpush1.msra.mxu0 0.0
    %96 = vmatprep.subr.mxu0 0.0
    %97 = vmatpush1.msra.mxu0 0.0
    %98 = vmatprep.subr.mxu0 0.0
    %99 = vmatpush1.msra.mxu0 0.0
    %100 = vmatprep.subr.mxu0 0.0
    %101 = vmatpush1.msra.mxu0 0.0
    %102 = vmatprep.subr.mxu0 0.0
    %103 = vmatpush1.msra.mxu0 0.0
    %104 = vmatprep.subr.mxu0 0.0
    %105 = vmatpush1.msra.mxu0 0.0
    %106 = vmatprep.subr.mxu0 0.0
    %107 = vmatpush1.msra.mxu0 0.0
    %108 = vmatprep.subr.mxu0 0.0
    %109 = vmatpush1.msra.mxu0 0.0
    %110 = vmatprep.subr.mxu0 0.0
    %111 = vmatpush1.msra.mxu0 0.0
    %112 = vmatprep.subr.mxu0 0.0
    %113 = vmatpush1.msra.mxu0 0.0
    %114 = vmatprep.subr.mxu0 0.0
    %115 = vmatpush1.msra.mxu0 0.0
    %116 = vmatprep.subr.mxu0 0.0
    %117 = vmatpush1.msra.mxu0 0.0
    %118 = vmatprep.subr.mxu0 0.0
    %119 = vmatpush1.msra.mxu0 0.0
    %120 = vmatprep.subr.mxu0 0.0
    %121 = vmatpush1.msra.mxu0 0.0
    %122 = vmatprep.subr.mxu0 0.0
    %123 = vmatpush1.msra.mxu0 0.0
    %124 = vmatprep.subr.mxu0 0.0
    %125 = vmatpush1.msra.mxu0 0.0
    %126 = vmatprep.subr.mxu0 0.0
    %127 = vmatpush1.msra.mxu0 0.0
    %128 = vmatprep.subr.mxu0 0.0
    %129 = vmatpush1.msra.mxu0 0.0
    %130 = vmatprep.subr.mxu0 0.0
    %131 = vmatpush1.msra.mxu0 0.0
    %132 = vmatprep.subr.mxu0 0.0
    %133 = vmatpush1.msra.mxu0 0.0
    %134 = vmatprep.subr.mxu0 0.0
    %135 = vmatpush1.msra.mxu0 0.0
    %136 = vmatprep.subr.mxu0 0.0
    %137 = vmatpush1.msra.mxu0 0.0
    %138 = vmatprep.subr.mxu0 0.0
    %139 = vmatpush1.msra.mxu0 0.0
    %140 = vmatprep.subr.mxu0 0.0
    %141 = vmatpush1.msra.mxu0 0.0
    %142 = vmatprep.subr.mxu0 0.0
    %143 = vmatpush1.msra.mxu0 0.0
    %144 = vmatprep.subr.mxu0 0.0
    %145 = vmatpush1.msra.mxu0 0.0
    %146 = vmatprep.subr.mxu0 0.0
    %147 = vmatpush1.msra.mxu0 0.0
    %148 = vmatprep.subr.mxu0 0.0
    %149 = vmatpush1.msra.mxu0 0.0
    %150 = vmatprep.mubr.f32.mxu0 0.0
    %151 = vmatmul.mubr.f32.gmra.mrb[0].mxu0 %v81
    %v152 = vpop.f32.mrb[0].mxu0
    %v153 = vadd.f32 %v77, %v152
    %v154 = vpop.f32.mrb[0].mxu0
    %155 = vmatprep.mubr.f32.mxu0 0.0
    %156 = vmatmul.mubr.f32.gmra.mrb[0].mxu0 %v84
    %v157 = vpop.f32.mrb[0].mxu0
    %v158 = vadd.f32 %v77, %v157
    %v159 = vpop.f32.mrb[0].mxu0
    %160 = vdwg.mxu0
    %162 = vrot.lane.b32.xlu0 %v153, 96
    %v163 = vpop.permute.xlu0 %162
    %vm164 = vcmask 64512
    %v165 = vsel %vm164, %v153, 0
    %v167 = vsel %vm164, %v163, 0
    %169 = vmatprep.subr.mxu0 0.0
    %170 = vmatpush1.xpose.msra.mxu0 %v167
    %171 = vmatprep.subr.mxu0 0.0
    %172 = vmatpush1.xpose.msra.mxu0 0.0
    %173 = vmatprep.subr.mxu0 0.0
    %174 = vmatpush1.xpose.msra.mxu0 0.0
    %175 = vmatprep.subr.mxu0 0.0
    %176 = vmatpush1.xpose.msra.mxu0 0.0
    %177 = vmatprep.subr.mxu0 0.0
    %178 = vmatpush1.xpose.msra.mxu0 0.0
    %179 = vmatprep.subr.mxu0 0.0
    %180 = vmatpush1.xpose.msra.mxu0 0.0
    %181 = vmatprep.subr.mxu0 0.0
    %182 = vmatpush1.xpose.msra.mxu0 0.0
    %183 = vmatprep.subr.mxu0 0.0
    %184 = vmatpush1.xpose.msra.mxu0 0.0
    %185 = vmatprep.subr.mxu0 0.0
    %186 = vmatpush1.xpose.msra.mxu0 0.0
    %187 = vmatprep.subr.mxu0 0.0
    %188 = vmatpush1.xpose.msra.mxu0 0.0
    %189 = vmatprep.subr.mxu0 0.0
    %190 = vmatpush1.xpose.msra.mxu0 0.0
    %191 = vmatprep.subr.mxu0 0.0
    %192 = vmatpush1.xpose.msra.mxu0 0.0
    %193 = vmatprep.subr.mxu0 0.0
    %194 = vmatpush1.xpose.msra.mxu0 0.0
    %195 = vmatprep.subr.mxu0 0.0
    %196 = vmatpush1.xpose.msra.mxu0 0.0
    %197 = vmatprep.subr.mxu0 0.0
    %198 = vmatpush1.xpose.msra.mxu0 0.0
    %199 = vmatprep.subr.mxu0 0.0
    %200 = vmatpush1.xpose.msra.mxu0 0.0
    %201 = vmatprep.subr.mxu0 0.0
    %202 = vmatpush1.xpose.msra.mxu0 0.0
    %203 = vmatprep.subr.mxu0 0.0
    %204 = vmatpush1.xpose.msra.mxu0 0.0
    %205 = vmatprep.subr.mxu0 0.0
    %206 = vmatpush1.xpose.msra.mxu0 0.0
    %207 = vmatprep.subr.mxu0 0.0
    %208 = vmatpush1.xpose.msra.mxu0 0.0
    %209 = vmatprep.subr.mxu0 0.0
    %210 = vmatpush1.xpose.msra.mxu0 0.0
    %211 = vmatprep.subr.mxu0 0.0
    %212 = vmatpush1.xpose.msra.mxu0 0.0
    %213 = vmatprep.subr.mxu0 0.0
    %214 = vmatpush1.xpose.msra.mxu0 0.0
    %215 = vmatprep.subr.mxu0 0.0
    %216 = vmatpush1.xpose.msra.mxu0 0.0
    %217 = vmatprep.subr.mxu0 0.0
    %218 = vmatpush1.xpose.msra.mxu0 0.0
    %219 = vmatprep.subr.mxu0 0.0
    %220 = vmatpush1.xpose.msra.mxu0 0.0
    %221 = vmatprep.subr.mxu0 0.0
    %222 = vmatpush1.xpose.msra.mxu0 0.0
    %223 = vmatprep.subr.mxu0 0.0
    %224 = vmatpush1.xpose.msra.mxu0 0.0
    %225 = vmatprep.subr.mxu0 0.0
    %226 = vmatpush1.xpose.msra.mxu0 0.0
    %227 = vmatprep.subr.mxu0 0.0
    %228 = vmatpush1.xpose.msra.mxu0 0.0
    %229 = vmatprep.subr.mxu0 0.0
    %230 = vmatpush1.xpose.msra.mxu0 0.0
    %231 = vmatprep.subr.mxu0 0.0
    %232 = vmatpush1.xpose.msra.mxu0 0.0
    %233 = vmatprep.mubr.f32.mxu0 0.0
    %234 = vmatmul.mubr.f32.gmra.mrb[0].mxu0 %v165
    %v235 = vpop.f32.mrb[0].mxu0
    %v236 = vadd.f32 0.0, %v235
    %v237 = vpop.f32.mrb[0].mxu0
    %238 = vdwg.mxu0
    %v239 = vmul.f32 %v236, 0.35355338
    %v240 = vsel %vm164, %v239, -inf
    %241 = vmax.xlane.f32.xlu0 %v240
    %v242 = vpop.xlane.xlu0 %241
    %v243 = vsub.f32 %v239, %v242
    %v244 = vmul.f32 %v243, 1.442695
    %v245 = vpow.pop %v244
    %v246 = vsel %vm164, %v245, 0.0
    %247 = vadd.xlane.f32.xlu0 %v246
    %v248 = vpop.xlane.xlu0 %247
    %v249 = vrcp.pop %v248
    %v250 = vmul.f32 %v245, %v249
    %251 = vrot.lane.b32.xlu0 %v153, 64
    %v252 = vpop.permute.xlu0 %251
    %v255 = vsel %vm164, %v250, 0
    %257 = vmatprep.subr.mxu0 0.0
    %258 = vmatpush1.msra.mxu0 %v252
    %259 = vmatprep.subr.mxu0 0.0
    %260 = vmatpush1.msra.mxu0 0.0
    %261 = vmatprep.subr.mxu0 0.0
    %262 = vmatpush1.msra.mxu0 0.0
    %263 = vmatprep.subr.mxu0 0.0
    %264 = vmatpush1.msra.mxu0 0.0
    %265 = vmatprep.subr.mxu0 0.0
    %266 = vmatpush1.msra.mxu0 0.0
    %267 = vmatprep.subr.mxu0 0.0
    %268 = vmatpush1.msra.mxu0 0.0
    %269 = vmatprep.subr.mxu0 0.0
    %270 = vmatpush1.msra.mxu0 0.0
    %271 = vmatprep.subr.mxu0 0.0
    %272 = vmatpush1.msra.mxu0 0.0
    %273 = vmatprep.subr.mxu0 0.0
    %274 = vmatpush1.msra.mxu0 0.0
    %275 = vmatprep.subr.mxu0 0.0
    %276 = vmatpush1.msra.mxu0 0.0
    %277 = vmatprep.subr.mxu0 0.0
    %278 = vmatpush1.msra.mxu0 0.0
    %279 = vmatprep.subr.mxu0 0.0
    %280 = vmatpush1.msra.mxu0 0.0
    %281 = vmatprep.subr.mxu0 0.0
    %282 = vmatpush1.msra.mxu0 0.0
    %283 = vmatprep.subr.mxu0 0.0
    %284 = vmatpush1.msra.mxu0 0.0
    %285 = vmatprep.subr.mxu0 0.0
    %286 = vmatpush1.msra.mxu0 0.0
    %287 = vmatprep.subr.mxu0 0.0
    %288 = vmatpush1.msra.mxu0 0.0
    %289 = vmatprep.subr.mxu0 0.0
    %290 = vmatpush1.msra.mxu0 0.0
    %291 = vmatprep.subr.mxu0 0.0
    %292 = vmatpush1.msra.mxu0 0.0
    %293 = vmatprep.subr.mxu0 0.0
    %294 = vmatpush1.msra.mxu0 0.0
    %295 = vmatprep.subr.mxu0 0.0
    %296 = vmatpush1.msra.mxu0 0.0
    %297 = vmatprep.subr.mxu0 0.0
    %298 = vmatpush1.msra.mxu0 0.0
    %299 = vmatprep.subr.mxu0 0.0
    %300 = vmatpush1.msra.mxu0 0.0
    %301 = vmatprep.subr.mxu0 0.0
    %302 = vmatpush1.msra.mxu0 0.0
    %303 = vmatprep.subr.mxu0 0.0
    %304 = vmatpush1.msra.mxu0 0.0
    %305 = vmatprep.subr.mxu0 0.0
    %306 = vmatpush1.msra.mxu0 0.0
    %307 = vmatprep.subr.mxu0 0.0
    %308 = vmatpush1.msra.mxu0 0.0
    %309 = vmatprep.subr.mxu0 0.0
    %310 = vmatpush1.msra.mxu0 0.0
    %311 = vmatprep.subr.mxu0 0.0
    %312 = vmatpush1.msra.mxu0 0.0
    %313 = vmatprep.subr.mxu0 0.0
    %314 = vmatpush1.msra.mxu0 0.0
    %315 = vmatprep.subr.mxu0 0.0
    %316 = vmatpush1.msra.mxu0 0.0
    %317 = vmatprep.subr.mxu0 0.0
    %318 = vmatpush1.msra.mxu0 0.0
    %319 = vmatprep.subr.mxu0 0.0
    %320 = vmatpush1.msra.mxu0 0.0
    %321 = vmatprep.mubr.f32.mxu0 0.0
    %322 = vmatmul.mubr.f32.gmra.mrb[0].mxu0 %v255
    %v323 = vpop.f32.mrb[0].mxu0
    %v324 = vadd.f32 0.0, %v323
    %v325 = vpop.f32.mrb[0].mxu0
    %326 = vdwg.mxu0
    %327 = vrot.lane.b32.xlu0 %v153, 120
    %v328 = vpop.permute.xlu0 %327
    %329 = vrot.lane.b32.xlu0 %v153, 88
    %v330 = vpop.permute.xlu0 %329
    %v331 = vsel %vm164, %v328, 0
    %v333 = vsel %vm164, %v330, 0
    %335 = vmatprep.subr.mxu0 0.0
    %336 = vmatpush1.xpose.msra.mxu0 %v333
    %337 = vmatprep.subr.mxu0 0.0
    %338 = vmatpush1.xpose.msra.mxu0 0.0
    %339 = vmatprep.subr.mxu0 0.0
    %340 = vmatpush1.xpose.msra.mxu0 0.0
    %341 = vmatprep.subr.mxu0 0.0
    %342 = vmatpush1.xpose.msra.mxu0 0.0
    %343 = vmatprep.subr.mxu0 0.0
    %344 = vmatpush1.xpose.msra.mxu0 0.0
    %345 = vmatprep.subr.mxu0 0.0
    %346 = vmatpush1.xpose.msra.mxu0 0.0
    %347 = vmatprep.subr.mxu0 0.0
    %348 = vmatpush1.xpose.msra.mxu0 0.0
    %349 = vmatprep.subr.mxu0 0.0
    %350 = vmatpush1.xpose.msra.mxu0 0.0
    %351 = vmatprep.subr.mxu0 0.0
    %352 = vmatpush1.xpose.msra.mxu0 0.0
    %353 = vmatprep.subr.mxu0 0.0
    %354 = vmatpush1.xpose.msra.mxu0 0.0
    %355 = vmatprep.subr.mxu0 0.0
    %356 = vmatpush1.xpose.msra.mxu0 0.0
    %357 = vmatprep.subr.mxu0 0.0
    %358 = vmatpush1.xpose.msra.mxu0 0.0
    %359 = vmatprep.subr.mxu0 0.0
    %360 = vmatpush1.xpose.msra.mxu0 0.0
    %361 = vmatprep.subr.mxu0 0.0
    %362 = vmatpush1.xpose.msra.mxu0 0.0
    %363 = vmatprep.subr.mxu0 0.0
    %364 = vmatpush1.xpose.msra.mxu0 0.0
    %365 = vmatprep.subr.mxu0 0.0
    %366 = vmatpush1.xpose.msra.mxu0 0.0
    %367 = vmatprep.subr.mxu0 0.0
    %368 = vmatpush1.xpose.msra.mxu0 0.0
    %369 = vmatprep.subr.mxu0 0.0
    %370 = vmatpush1.xpose.msra.mxu0 0.0
    %371 = vmatprep.subr.mxu0 0.0
    %372 = vmatpush1.xpose.msra.mxu0 0.0
    %373 = vmatprep.subr.mxu0 0.0
    %374 = vmatpush1.xpose.msra.mxu0 0.0
    %375 = vmatprep.subr.mxu0 0.0
    %376 = vmatpush1.xpose.msra.mxu0 0.0
    %377 = vmatprep.subr.mxu0 0.0
    %378 = vmatpush1.xpose.msra.mxu0 0.0
    %379 = vmatprep.subr.mxu0 0.0
    %380 = vmatpush1.xpose.msra.mxu0 0.0
    %381 = vmatprep.subr.mxu0 0.0
    %382 = vmatpush1.xpose.msra.mxu0 0.0
    %383 = vmatprep.subr.mxu0 0.0
    %384 = vmatpush1.xpose.msra.mxu0 0.0
    %385 = vmatprep.subr.mxu0 0.0
    %386 = vmatpush1.xpose.msra.mxu0 0.0
    %387 = vmatprep.subr.mxu0 0.0
    %388 = vmatpush1.xpose.msra.mxu0 0.0
    %389 = vmatprep.subr.mxu0 0.0
    %390 = vmatpush1.xpose.msra.mxu0 0.0
    %391 = vmatprep.subr.mxu0 0.0
    %392 = vmatpush1.xpose.msra.mxu0 0.0
    %393 = vmatprep.subr.mxu0 0.0
    %394 = vmatpush1.xpose.msra.mxu0 0.0
    %395 = vmatprep.subr.mxu0 0.0
    %396 = vmatpush1.xpose.msra.mxu0 0.0
    %397 = vmatprep.subr.mxu0 0.0
    %398 = vmatpush1.xpose.msra.mxu0 0.0
    %399 = vmatprep.mubr.f32.mxu0 0.0
    %400 = vmatmul.mubr.f32.gmra.mrb[0].mxu0 %v331
    %v401 = vpop.f32.mrb[0].mxu0
    %v402 = vadd.f32 0.0, %v401
    %v403 = vpop.f32.mrb[0].mxu0
    %404 = vdwg.mxu0
    %v405 = vmul.f32 %v402, 0.35355338
    %v406 = vsel %vm164, %v405, -inf
    %407 = vmax.xlane.f32.xlu0 %v406
    %v408 = vpop.xlane.xlu0 %407
    %v409 = vsub.f32 %v405, %v408
    %v410 = vmul.f32 %v409, 1.442695
    %v411 = vpow.pop %v410
    %v412 = vsel %vm164, %v411, 0.0
    %413 = vadd.xlane.f32.xlu0 %v412
    %v414 = vpop.xlane.xlu0 %413
    %v415 = vrcp.pop %v414
    %v416 = vmul.f32 %v411, %v415
    %417 = vrot.lane.b32.xlu0 %v153, 56
    %v418 = vpop.permute.xlu0 %417
    %v421 = vsel %vm164, %v416, 0
    %423 = vmatprep.subr.mxu0 0.0
    %424 = vmatpush1.msra.mxu0 %v418
    %425 = vmatprep.subr.mxu0 0.0
    %426 = vmatpush1.msra.mxu0 0.0
    %427 = vmatprep.subr.mxu0 0.0
    %428 = vmatpush1.msra.mxu0 0.0
    %429 = vmatprep.subr.mxu0 0.0
    %430 = vmatpush1.msra.mxu0 0.0
    %431 = vmatprep.subr.mxu0 0.0
    %432 = vmatpush1.msra.mxu0 0.0
    %433 = vmatprep.subr.mxu0 0.0
    %434 = vmatpush1.msra.mxu0 0.0
    %435 = vmatprep.subr.mxu0 0.0
    %436 = vmatpush1.msra.mxu0 0.0
    %437 = vmatprep.subr.mxu0 0.0
    %438 = vmatpush1.msra.mxu0 0.0
    %439 = vmatprep.subr.mxu0 0.0
    %440 = vmatpush1.msra.mxu0 0.0
    %441 = vmatprep.subr.mxu0 0.0
    %442 = vmatpush1.msra.mxu0 0.0
    %443 = vmatprep.subr.mxu0 0.0
    %444 = vmatpush1.msra.mxu0 0.0
    %445 = vmatprep.subr.mxu0 0.0
    %446 = vmatpush1.msra.mxu0 0.0
    %447 = vmatprep.subr.mxu0 0.0
    %448 = vmatpush1.msra.mxu0 0.0
    %449 = vmatprep.subr.mxu0 0.0
    %450 = vmatpush1.msra.mxu0 0.0
    %451 = vmatprep.subr.mxu0 0.0
    %452 = vmatpush1.msra.mxu0 0.0
    %453 = vmatprep.subr.mxu0 0.0
    %454 = vmatpush1.msra.mxu0 0.0
    %455 = vmatprep.subr.mxu0 0.0
    %456 = vmatpush1.msra.mxu0 0.0
    %457 = vmatprep.subr.mxu0 0.0
    %458 = vmatpush1.msra.mxu0 0.0
    %459 = vmatprep.subr.mxu0 0.0
    %460 = vmatpush1.msra.mxu0 0.0
    %461 = vmatprep.subr.mxu0 0.0
    %462 = vmatpush1.msra.mxu0 0.0
    %463 = vmatprep.subr.mxu0 0.0
    %464 = vmatpush1.msra.mxu0 0.0
    %465 = vmatprep.subr.mxu0 0.0
    %466 = vmatpush1.msra.mxu0 0.0
    %467 = vmatprep.subr.mxu0 0.0
    %468 = vmatpush1.msra.mxu0 0.0
    %469 = vmatprep.subr.mxu0 0.0
    %470 = vmatpush1.msra.mxu0 0.0
    %471 = vmatprep.subr.mxu0 0.0
    %472 = vmatpush1.msra.mxu0 0.0
    %473 = vmatprep.subr.mxu0 0.0
    %474 = vmatpush1.msra.mxu0 0.0
    %475 = vmatprep.subr.mxu0 0.0
    %476 = vmatpush1.msra.mxu0 0.0
    %477 = vmatprep.subr.mxu0 0.0
    %478 = vmatpush1.msra.mxu0 0.0
    %479 = vmatprep.subr.mxu0 0.0
    %480 = vmatpush1.msra.mxu0 0.0
    %481 = vmatprep.subr.mxu0 0.0
    %482 = vmatpush1.msra.mxu0 0.0
    %483 = vmatprep.subr.mxu0 0.0
    %484 = vmatpush1.msra.mxu0 0.0
    %485 = vmatprep.subr.mxu0 0.0
    %486 = vmatpush1.msra.mxu0 0.0
    %487 = vmatprep.mubr.f32.mxu0 0.0
    %488 = vmatmul.mubr.f32.gmra.mrb[0].mxu0 %v421
    %v489 = vpop.f32.mrb[0].mxu0
    %v490 = vadd.f32 0.0, %v489
    %v491 = vpop.f32.mrb[0].mxu0
    %492 = vdwg.mxu0
    %493 = vrot.lane.b32.xlu0 %v153, 112
    %v494 = vpop.permute.xlu0 %493
    %495 = vrot.lane.b32.xlu0 %v153, 80
    %v496 = vpop.permute.xlu0 %495
    %v497 = vsel %vm164, %v494, 0
    %v499 = vsel %vm164, %v496, 0
    %501 = vmatprep.subr.mxu0 0.0
    %502 = vmatpush1.xpose.msra.mxu0 %v499
    %503 = vmatprep.subr.mxu0 0.0
    %504 = vmatpush1.xpose.msra.mxu0 0.0
    %505 = vmatprep.subr.mxu0 0.0
    %506 = vmatpush1.xpose.msra.mxu0 0.0
    %507 = vmatprep.subr.mxu0 0.0
    %508 = vmatpush1.xpose.msra.mxu0 0.0
    %509 = vmatprep.subr.mxu0 0.0
    %510 = vmatpush1.xpose.msra.mxu0 0.0
    %511 = vmatprep.subr.mxu0 0.0
    %512 = vmatpush1.xpose.msra.mxu0 0.0
    %513 = vmatprep.subr.mxu0 0.0
    %514 = vmatpush1.xpose.msra.mxu0 0.0
    %515 = vmatprep.subr.mxu0 0.0
    %516 = vmatpush1.xpose.msra.mxu0 0.0
    %517 = vmatprep.subr.mxu0 0.0
    %518 = vmatpush1.xpose.msra.mxu0 0.0
    %519 = vmatprep.subr.mxu0 0.0
    %520 = vmatpush1.xpose.msra.mxu0 0.0
    %521 = vmatprep.subr.mxu0 0.0
    %522 = vmatpush1.xpose.msra.mxu0 0.0
    %523 = vmatprep.subr.mxu0 0.0
    %524 = vmatpush1.xpose.msra.mxu0 0.0
    %525 = vmatprep.subr.mxu0 0.0
    %526 = vmatpush1.xpose.msra.mxu0 0.0
    %527 = vmatprep.subr.mxu0 0.0
    %528 = vmatpush1.xpose.msra.mxu0 0.0
    %529 = vmatprep.subr.mxu0 0.0
    %530 = vmatpush1.xpose.msra.mxu0 0.0
    %531 = vmatprep.subr.mxu0 0.0
    %532 = vmatpush1.xpose.msra.mxu0 0.0
    %533 = vmatprep.subr.mxu0 0.0
    %534 = vmatpush1.xpose.msra.mxu0 0.0
    %535 = vmatprep.subr.mxu0 0.0
    %536 = vmatpush1.xpose.msra.mxu0 0.0
    %537 = vmatprep.subr.mxu0 0.0
    %538 = vmatpush1.xpose.msra.mxu0 0.0
    %539 = vmatprep.subr.mxu0 0.0
    %540 = vmatpush1.xpose.msra.mxu0 0.0
    %541 = vmatprep.subr.mxu0 0.0
    %542 = vmatpush1.xpose.msra.mxu0 0.0
    %543 = vmatprep.subr.mxu0 0.0
    %544 = vmatpush1.xpose.msra.mxu0 0.0
    %545 = vmatprep.subr.mxu0 0.0
    %546 = vmatpush1.xpose.msra.mxu0 0.0
    %547 = vmatprep.subr.mxu0 0.0
    %548 = vmatpush1.xpose.msra.mxu0 0.0
    %549 = vmatprep.subr.mxu0 0.0
    %550 = vmatpush1.xpose.msra.mxu0 0.0
    %551 = vmatprep.subr.mxu0 0.0
    %552 = vmatpush1.xpose.msra.mxu0 0.0
    %553 = vmatprep.subr.mxu0 0.0
    %554 = vmatpush1.xpose.msra.mxu0 0.0
    %555 = vmatprep.subr.mxu0 0.0
    %556 = vmatpush1.xpose.msra.mxu0 0.0
    %557 = vmatprep.subr.mxu0 0.0
    %558 = vmatpush1.xpose.msra.mxu0 0.0
    %559 = vmatprep.subr.mxu0 0.0
    %560 = vmatpush1.xpose.msra.mxu0 0.0
    %561 = vmatprep.subr.mxu0 0.0
    %562 = vmatpush1.xpose.msra.mxu0 0.0
    %563 = vmatprep.subr.mxu0 0.0
    %564 = vmatpush1.xpose.msra.mxu0 0.0
    %565 = vmatprep.mubr.f32.mxu0 0.0
    %566 = vmatmul.mubr.f32.gmra.mrb[0].mxu0 %v497
    %v567 = vpop.f32.mrb[0].mxu0
    %v568 = vadd.f32 0.0, %v567
    %v569 = vpop.f32.mrb[0].mxu0
    %570 = vdwg.mxu0
    %v571 = vmul.f32 %v568, 0.35355338
    %v572 = vsel %vm164, %v571, -inf
    %573 = vmax.xlane.f32.xlu0 %v572
    %v574 = vpop.xlane.xlu0 %573
    %v575 = vsub.f32 %v571, %v574
    %v576 = vmul.f32 %v575, 1.442695
    %v577 = vpow.pop %v576
    %v578 = vsel %vm164, %v577, 0.0
    %579 = vadd.xlane.f32.xlu0 %v578
    %v580 = vpop.xlane.xlu0 %579
    %v581 = vrcp.pop %v580
    %v582 = vmul.f32 %v577, %v581
    %583 = vrot.lane.b32.xlu0 %v153, 48
    %v584 = vpop.permute.xlu0 %583
    %v587 = vsel %vm164, %v582, 0
    %589 = vmatprep.subr.mxu0 0.0
    %590 = vmatpush1.msra.mxu0 %v584
    %591 = vmatprep.subr.mxu0 0.0
    %592 = vmatpush1.msra.mxu0 0.0
    %593 = vmatprep.subr.mxu0 0.0
    %594 = vmatpush1.msra.mxu0 0.0
    %595 = vmatprep.subr.mxu0 0.0
    %596 = vmatpush1.msra.mxu0 0.0
    %597 = vmatprep.subr.mxu0 0.0
    %598 = vmatpush1.msra.mxu0 0.0
    %599 = vmatprep.subr.mxu0 0.0
    %600 = vmatpush1.msra.mxu0 0.0
    %601 = vmatprep.subr.mxu0 0.0
    %602 = vmatpush1.msra.mxu0 0.0
    %603 = vmatprep.subr.mxu0 0.0
    %604 = vmatpush1.msra.mxu0 0.0
    %605 = vmatprep.subr.mxu0 0.0
    %606 = vmatpush1.msra.mxu0 0.0
    %607 = vmatprep.subr.mxu0 0.0
    %608 = vmatpush1.msra.mxu0 0.0
    %609 = vmatprep.subr.mxu0 0.0
    %610 = vmatpush1.msra.mxu0 0.0
    %611 = vmatprep.subr.mxu0 0.0
    %612 = vmatpush1.msra.mxu0 0.0
    %613 = vmatprep.subr.mxu0 0.0
    %614 = vmatpush1.msra.mxu0 0.0
    %615 = vmatprep.subr.mxu0 0.0
    %616 = vmatpush1.msra.mxu0 0.0
    %617 = vmatprep.subr.mxu0 0.0
    %618 = vmatpush1.msra.mxu0 0.0
    %619 = vmatprep.subr.mxu0 0.0
    %620 = vmatpush1.msra.mxu0 0.0
    %621 = vmatprep.subr.mxu0 0.0
    %622 = vmatpush1.msra.mxu0 0.0
    %623 = vmatprep.subr.mxu0 0.0
    %624 = vmatpush1.msra.mxu0 0.0
    %625 = vmatprep.subr.mxu0 0.0
    %626 = vmatpush1.msra.mxu0 0.0
    %627 = vmatprep.subr.mxu0 0.0
    %628 = vmatpush1.msra.mxu0 0.0
    %629 = vmatprep.subr.mxu0 0.0
    %630 = vmatpush1.msra.mxu0 0.0
    %631 = vmatprep.subr.mxu0 0.0
    %632 = vmatpush1.msra.mxu0 0.0
    %633 = vmatprep.subr.mxu0 0.0
    %634 = vmatpush1.msra.mxu0 0.0
    %635 = vmatprep.subr.mxu0 0.0
    %636 = vmatpush1.msra.mxu0 0.0
    %637 = vmatprep.subr.mxu0 0.0
    %638 = vmatpush1.msra.mxu0 0.0
    %639 = vmatprep.subr.mxu0 0.0
    %640 = vmatpush1.msra.mxu0 0.0
    %641 = vmatprep.subr.mxu0 0.0
    %642 = vmatpush1.msra.mxu0 0.0
    %643 = vmatprep.subr.mxu0 0.0
    %644 = vmatpush1.msra.mxu0 0.0
    %645 = vmatprep.subr.mxu0 0.0
    %646 = vmatpush1.msra.mxu0 0.0
    %647 = vmatprep.subr.mxu0 0.0
    %648 = vmatpush1.msra.mxu0 0.0
    %649 = vmatprep.subr.mxu0 0.0
    %650 = vmatpush1.msra.mxu0 0.0
    %651 = vmatprep.subr.mxu0 0.0
    %652 = vmatpush1.msra.mxu0 0.0
    %653 = vmatprep.mubr.f32.mxu0 0.0
    %654 = vmatmul.mubr.f32.gmra.mrb[0].mxu0 %v587
    %v655 = vpop.f32.mrb[0].mxu0
    %v656 = vadd.f32 0.0, %v655
    %v657 = vpop.f32.mrb[0].mxu0
    %658 = vdwg.mxu0
    %659 = vrot.lane.b32.xlu0 %v153, 104
    %v660 = vpop.permute.xlu0 %659
    %661 = vrot.lane.b32.xlu0 %v153, 72
    %v662 = vpop.permute.xlu0 %661
    %v663 = vsel %vm164, %v660, 0
    %v665 = vsel %vm164, %v662, 0
    %667 = vmatprep.subr.mxu0 0.0
    %668 = vmatpush1.xpose.msra.mxu0 %v665
    %669 = vmatprep.subr.mxu0 0.0
    %670 = vmatpush1.xpose.msra.mxu0 0.0
    %671 = vmatprep.subr.mxu0 0.0
    %672 = vmatpush1.xpose.msra.mxu0 0.0
    %673 = vmatprep.subr.mxu0 0.0
    %674 = vmatpush1.xpose.msra.mxu0 0.0
    %675 = vmatprep.subr.mxu0 0.0
    %676 = vmatpush1.xpose.msra.mxu0 0.0
    %677 = vmatprep.subr.mxu0 0.0
    %678 = vmatpush1.xpose.msra.mxu0 0.0
    %679 = vmatprep.subr.mxu0 0.0
    %680 = vmatpush1.xpose.msra.mxu0 0.0
    %681 = vmatprep.subr.mxu0 0.0
    %682 = vmatpush1.xpose.msra.mxu0 0.0
    %683 = vmatprep.subr.mxu0 0.0
    %684 = vmatpush1.xpose.msra.mxu0 0.0
    %685 = vmatprep.subr.mxu0 0.0
    %686 = vmatpush1.xpose.msra.mxu0 0.0
    %687 = vmatprep.subr.mxu0 0.0
    %688 = vmatpush1.xpose.msra.mxu0 0.0
    %689 = vmatprep.subr.mxu0 0.0
    %690 = vmatpush1.xpose.msra.mxu0 0.0
    %691 = vmatprep.subr.mxu0 0.0
    %692 = vmatpush1.xpose.msra.mxu0 0.0
    %693 = vmatprep.subr.mxu0 0.0
    %694 = vmatpush1.xpose.msra.mxu0 0.0
    %695 = vmatprep.subr.mxu0 0.0
    %696 = vmatpush1.xpose.msra.mxu0 0.0
    %697 = vmatprep.subr.mxu0 0.0
    %698 = vmatpush1.xpose.msra.mxu0 0.0
    %699 = vmatprep.subr.mxu0 0.0
    %700 = vmatpush1.xpose.msra.mxu0 0.0
    %701 = vmatprep.subr.mxu0 0.0
    %702 = vmatpush1.xpose.msra.mxu0 0.0
    %703 = vmatprep.subr.mxu0 0.0
    %704 = vmatpush1.xpose.msra.mxu0 0.0
    %705 = vmatprep.subr.mxu0 0.0
    %706 = vmatpush1.xpose.msra.mxu0 0.0
    %707 = vmatprep.subr.mxu0 0.0
    %708 = vmatpush1.xpose.msra.mxu0 0.0
    %709 = vmatprep.subr.mxu0 0.0
    %710 = vmatpush1.xpose.msra.mxu0 0.0
    %711 = vmatprep.subr.mxu0 0.0
    %712 = vmatpush1.xpose.msra.mxu0 0.0
    %713 = vmatprep.subr.mxu0 0.0
    %714 = vmatpush1.xpose.msra.mxu0 0.0
    %715 = vmatprep.subr.mxu0 0.0
    %716 = vmatpush1.xpose.msra.mxu0 0.0
    %717 = vmatprep.subr.mxu0 0.0
    %718 = vmatpush1.xpose.msra.mxu0 0.0
    %719 = vmatprep.subr.mxu0 0.0
    %720 = vmatpush1.xpose.msra.mxu0 0.0
    %721 = vmatprep.subr.mxu0 0.0
    %722 = vmatpush1.xpose.msra.mxu0 0.0
    %723 = vmatprep.subr.mxu0 0.0
    %724 = vmatpush1.xpose.msra.mxu0 0.0
    %725 = vmatprep.subr.mxu0 0.0
    %726 = vmatpush1.xpose.msra.mxu0 0.0
    %727 = vmatprep.subr.mxu0 0.0
    %728 = vmatpush1.xpose.msra.mxu0 0.0
    %729 = vmatprep.subr.mxu0 0.0
    %730 = vmatpush1.xpose.msra.mxu0 0.0
    %731 = vmatprep.mubr.f32.mxu0 0.0
    %732 = vmatmul.mubr.f32.gmra.mrb[0].mxu0 %v663
    %v733 = vpop.f32.mrb[0].mxu0
    %v734 = vadd.f32 0.0, %v733
    %v735 = vpop.f32.mrb[0].mxu0
    %736 = vdwg.mxu0
    %v737 = vmul.f32 %v734, 0.35355338
    %v738 = vsel %vm164, %v737, -inf
    %739 = vmax.xlane.f32.xlu0 %v738
    %v740 = vpop.xlane.xlu0 %739
    %v741 = vsub.f32 %v737, %v740
    %v742 = vmul.f32 %v741, 1.442695
    %v743 = vpow.pop %v742
    %v744 = vsel %vm164, %v743, 0.0
    %745 = vadd.xlane.f32.xlu0 %v744
    %v746 = vpop.xlane.xlu0 %745
    %v747 = vrcp.pop %v746
    %v748 = vmul.f32 %v743, %v747
    %749 = vrot.lane.b32.xlu0 %v153, 40
    %v750 = vpop.permute.xlu0 %749
    %v753 = vsel %vm164, %v748, 0
    %755 = vmatprep.subr.mxu0 0.0
    %756 = vmatpush1.msra.mxu0 %v750
    %757 = vmatprep.subr.mxu0 0.0
    %758 = vmatpush1.msra.mxu0 0.0
    %759 = vmatprep.subr.mxu0 0.0
    %760 = vmatpush1.msra.mxu0 0.0
    %761 = vmatprep.subr.mxu0 0.0
    %762 = vmatpush1.msra.mxu0 0.0
    %763 = vmatprep.subr.mxu0 0.0
    %764 = vmatpush1.msra.mxu0 0.0
    %765 = vmatprep.subr.mxu0 0.0
    %766 = vmatpush1.msra.mxu0 0.0
    %767 = vmatprep.subr.mxu0 0.0
    %768 = vmatpush1.msra.mxu0 0.0
    %769 = vmatprep.subr.mxu0 0.0
    %770 = vmatpush1.msra.mxu0 0.0
    %771 = vmatprep.subr.mxu0 0.0
    %772 = vmatpush1.msra.mxu0 0.0
    %773 = vmatprep.subr.mxu0 0.0
    %774 = vmatpush1.msra.mxu0 0.0
    %775 = vmatprep.subr.mxu0 0.0
    %776 = vmatpush1.msra.mxu0 0.0
    %777 = vmatprep.subr.mxu0 0.0
    %778 = vmatpush1.msra.mxu0 0.0
    %779 = vmatprep.subr.mxu0 0.0
    %780 = vmatpush1.msra.mxu0 0.0
    %781 = vmatprep.subr.mxu0 0.0
    %782 = vmatpush1.msra.mxu0 0.0
    %783 = vmatprep.subr.mxu0 0.0
    %784 = vmatpush1.msra.mxu0 0.0
    %785 = vmatprep.subr.mxu0 0.0
    %786 = vmatpush1.msra.mxu0 0.0
    %787 = vmatprep.subr.mxu0 0.0
    %788 = vmatpush1.msra.mxu0 0.0
    %789 = vmatprep.subr.mxu0 0.0
    %790 = vmatpush1.msra.mxu0 0.0
    %791 = vmatprep.subr.mxu0 0.0
    %792 = vmatpush1.msra.mxu0 0.0
    %793 = vmatprep.subr.mxu0 0.0
    %794 = vmatpush1.msra.mxu0 0.0
    %795 = vmatprep.subr.mxu0 0.0
    %796 = vmatpush1.msra.mxu0 0.0
    %797 = vmatprep.subr.mxu0 0.0
    %798 = vmatpush1.msra.mxu0 0.0
    %799 = vmatprep.subr.mxu0 0.0
    %800 = vmatpush1.msra.mxu0 0.0
    %801 = vmatprep.subr.mxu0 0.0
    %802 = vmatpush1.msra.mxu0 0.0
    %803 = vmatprep.subr.mxu0 0.0
    %804 = vmatpush1.msra.mxu0 0.0
    %805 = vmatprep.subr.mxu0 0.0
    %806 = vmatpush1.msra.mxu0 0.0
    %807 = vmatprep.subr.mxu0 0.0
    %808 = vmatpush1.msra.mxu0 0.0
    %809 = vmatprep.subr.mxu0 0.0
    %810 = vmatpush1.msra.mxu0 0.0
    %811 = vmatprep.subr.mxu0 0.0
    %812 = vmatpush1.msra.mxu0 0.0
    %813 = vmatprep.subr.mxu0 0.0
    %814 = vmatpush1.msra.mxu0 0.0
    %815 = vmatprep.subr.mxu0 0.0
    %816 = vmatpush1.msra.mxu0 0.0
    %817 = vmatprep.subr.mxu0 0.0
    %818 = vmatpush1.msra.mxu0 0.0
    %819 = vmatprep.mubr.f32.mxu0 0.0
    %820 = vmatmul.mubr.f32.gmra.mrb[0].mxu0 %v753
    %v821 = vpop.f32.mrb[0].mxu0
    %v822 = vadd.f32 0.0, %v821
    %v823 = vpop.f32.mrb[0].mxu0
    %824 = vdwg.mxu0
    %825 = vrot.lane.b32.xlu0 %v416, 8
    %v826 = vpop.permute.xlu0 %825
    %828 = vrot.lane.b32.xlu0 %v582, 16
    %v829 = vpop.permute.xlu0 %828
    %831 = vrot.lane.b32.xlu0 %v748, 24
    %v832 = vpop.permute.xlu0 %831
    %v834 = vsel %vm164, %v250, %v826
    %vm835 = vcmask 130048
    %v836 = vsel %vm835, %v834, %v829
    %vm837 = vcmask 195584
    %v838 = vsel %vm837, %v836, %v832
    %840 = vrot.lane.b32.xlu0 %v490, 8
    %v841 = vpop.permute.xlu0 %840
    %844 = vrot.lane.b32.xlu0 %v656, 16
    %v845 = vpop.permute.xlu0 %844
    %848 = vrot.lane.b32.xlu0 %v822, 24
    %v849 = vpop.permute.xlu0 %848
    %v851 = vsel %vm164, %v324, %v841
    %v852 = vsel %vm835, %v851, %v845
    %v853 = vsel %vm837, %v852, %v849
    %855 = vrot.lane.b32.xlu0 %v405, 1
    %v856 = vpop.permute.xlu0 %855
    %859 = vrot.lane.b32.xlu0 %v571, 2
    %v860 = vpop.permute.xlu0 %859
    %863 = vrot.lane.b32.xlu0 %v737, 3
    %v864 = vpop.permute.xlu0 %863
    %vm866 = vcmask 7168
    %v867 = vsel %vm866, %v239, %v856
    %vm868 = vcmask 15360
    %v869 = vsel %vm868, %v867, %v860
    %vm870 = vcmask 23552
    %v871 = vsel %vm870, %v869, %v864
    %vm872 = vcmask 31744
    %v873 = vsel %vm872, %v871, -inf
    %v874 = vrot.slane %v873, 4
    %v875 = vmax.f32 %v873, %v874
    %v876 = vrot.slane %v875, 2
    %v877 = vmax.f32 %v875, %v876
    %v878 = vrot.slane %v877, 1
    %v879 = vmax.f32 %v877, %v878
    %v880 = vsub.f32 %v871, %v879
    %v881 = vmul.f32 %v880, 1.442695
    %v882 = vpow.pop %v881
    %v883 = vsel %vm872, %v882, 0.0
    %v884 = vrot.slane %v883, 4
    %v885 = vadd.f32 %v883, %v884
    %v886 = vrot.slane %v885, 2
    %v887 = vadd.f32 %v885, %v886
    %v888 = vrot.slane %v887, 1
    %v889 = vadd.f32 %v887, %v888
    %v890 = vrcp.pop %v889
    %v891 = vmul.f32 %v882, %v890
    %893 = vrot.lane.b32.xlu0 %v158, 96
    %v894 = vpop.permute.xlu0 %893
    %v895 = vsel %vm164, %v158, 0
    %v897 = vsel %vm164, %v894, 0
    %899 = vmatprep.subr.mxu0 0.0
    %900 = vmatpush1.xpose.msra.mxu0 %v897
    %901 = vmatprep.subr.mxu0 0.0
    %902 = vmatpush1.xpose.msra.mxu0 0.0
    %903 = vmatprep.subr.mxu0 0.0
    %904 = vmatpush1.xpose.msra.mxu0 0.0
    %905 = vmatprep.subr.mxu0 0.0
    %906 = vmatpush1.xpose.msra.mxu0 0.0
    %907 = vmatprep.subr.mxu0 0.0
    %908 = vmatpush1.xpose.msra.mxu0 0.0
    %909 = vmatprep.subr.mxu0 0.0
    %910 = vmatpush1.xpose.msra.mxu0 0.0
    %911 = vmatprep.subr.mxu0 0.0
    %912 = vmatpush1.xpose.msra.mxu0 0.0
    %913 = vmatprep.subr.mxu0 0.0
    %914 = vmatpush1.xpose.msra.mxu0 0.0
    %915 = vmatprep.subr.mxu0 0.0
    %916 = vmatpush1.xpose.msra.mxu0 0.0
    %917 = vmatprep.subr.mxu0 0.0
    %918 = vmatpush1.xpose.msra.mxu0 0.0
    %919 = vmatprep.subr.mxu0 0.0
    %920 = vmatpush1.xpose.msra.mxu0 0.0
    %921 = vmatprep.subr.mxu0 0.0
    %922 = vmatpush1.xpose.msra.mxu0 0.0
    %923 = vmatprep.subr.mxu0 0.0
    %924 = vmatpush1.xpose.msra.mxu0 0.0
    %925 = vmatprep.subr.mxu0 0.0
    %926 = vmatpush1.xpose.msra.mxu0 0.0
    %927 = vmatprep.subr.mxu0 0.0
    %928 = vmatpush1.xpose.msra.mxu0 0.0
    %929 = vmatprep.subr.mxu0 0.0
    %930 = vmatpush1.xpose.msra.mxu0 0.0
    %931 = vmatprep.subr.mxu0 0.0
    %932 = vmatpush1.xpose.msra.mxu0 0.0
    %933 = vmatprep.subr.mxu0 0.0
    %934 = vmatpush1.xpose.msra.mxu0 0.0
    %935 = vmatprep.subr.mxu0 0.0
    %936 = vmatpush1.xpose.msra.mxu0 0.0
    %937 = vmatprep.subr.mxu0 0.0
    %938 = vmatpush1.xpose.msra.mxu0 0.0
    %939 = vmatprep.subr.mxu0 0.0
    %940 = vmatpush1.xpose.msra.mxu0 0.0
    %941 = vmatprep.subr.mxu0 0.0
    %942 = vmatpush1.xpose.msra.mxu0 0.0
    %943 = vmatprep.subr.mxu0 0.0
    %944 = vmatpush1.xpose.msra.mxu0 0.0
    %945 = vmatprep.subr.mxu0 0.0
    %946 = vmatpush1.xpose.msra.mxu0 0.0
    %947 = vmatprep.subr.mxu0 0.0
    %948 = vmatpush1.xpose.msra.mxu0 0.0
    %949 = vmatprep.subr.mxu0 0.0
    %950 = vmatpush1.xpose.msra.mxu0 0.0
    %951 = vmatprep.subr.mxu0 0.0
    %952 = vmatpush1.xpose.msra.mxu0 0.0
    %953 = vmatprep.subr.mxu0 0.0
    %954 = vmatpush1.xpose.msra.mxu0 0.0
    %955 = vmatprep.subr.mxu0 0.0
    %956 = vmatpush1.xpose.msra.mxu0 0.0
    %957 = vmatprep.subr.mxu0 0.0
    %958 = vmatpush1.xpose.msra.mxu0 0.0
    %959 = vmatprep.subr.mxu0 0.0
    %960 = vmatpush1.xpose.msra.mxu0 0.0
    %961 = vmatprep.subr.mxu0 0.0
    %962 = vmatpush1.xpose.msra.mxu0 0.0
    %963 = vmatprep.mubr.f32.mxu0 0.0
    %964 = vmatmul.mubr.f32.gmra.mrb[0].mxu0 %v895
    %v965 = vpop.f32.mrb[0].mxu0
    %v966 = vadd.f32 0.0, %v965
    %v967 = vpop.f32.mrb[0].mxu0
    %968 = vdwg.mxu0
    %v969 = vmul.f32 %v966, 0.35355338
    %v970 = vsel %vm164, %v969, -inf
    %971 = vmax.xlane.f32.xlu0 %v970
    %v972 = vpop.xlane.xlu0 %971
    %v973 = vsub.f32 %v969, %v972
    %v974 = vmul.f32 %v973, 1.442695
    %v975 = vpow.pop %v974
    %v976 = vsel %vm164, %v975, 0.0
    %977 = vadd.xlane.f32.xlu0 %v976
    %v978 = vpop.xlane.xlu0 %977
    %v979 = vrcp.pop %v978
    %v980 = vmul.f32 %v975, %v979
    %981 = vrot.lane.b32.xlu0 %v158, 64
    %v982 = vpop.permute.xlu0 %981
    %v985 = vsel %vm164, %v980, 0
    %987 = vmatprep.subr.mxu0 0.0
    %988 = vmatpush1.msra.mxu0 %v982
    %989 = vmatprep.subr.mxu0 0.0
    %990 = vmatpush1.msra.mxu0 0.0
    %991 = vmatprep.subr.mxu0 0.0
    %992 = vmatpush1.msra.mxu0 0.0
    %993 = vmatprep.subr.mxu0 0.0
    %994 = vmatpush1.msra.mxu0 0.0
    %995 = vmatprep.subr.mxu0 0.0
    %996 = vmatpush1.msra.mxu0 0.0
    %997 = vmatprep.subr.mxu0 0.0
    %998 = vmatpush1.msra.mxu0 0.0
    %999 = vmatprep.subr.mxu0 0.0
    %1000 = vmatpush1.msra.mxu0 0.0
    %1001 = vmatprep.subr.mxu0 0.0
    %1002 = vmatpush1.msra.mxu0 0.0
    %1003 = vmatprep.subr.mxu0 0.0
    %1004 = vmatpush1.msra.mxu0 0.0
    %1005 = vmatprep.subr.mxu0 0.0
    %1006 = vmatpush1.msra.mxu0 0.0
    %1007 = vmatprep.subr.mxu0 0.0
    %1008 = vmatpush1.msra.mxu0 0.0
    %1009 = vmatprep.subr.mxu0 0.0
    %1010 = vmatpush1.msra.mxu0 0.0
    %1011 = vmatprep.subr.mxu0 0.0
    %1012 = vmatpush1.msra.mxu0 0.0
    %1013 = vmatprep.subr.mxu0 0.0
    %1014 = vmatpush1.msra.mxu0 0.0
    %1015 = vmatprep.subr.mxu0 0.0
    %1016 = vmatpush1.msra.mxu0 0.0
    %1017 = vmatprep.subr.mxu0 0.0
    %1018 = vmatpush1.msra.mxu0 0.0
    %1019 = vmatprep.subr.mxu0 0.0
    %1020 = vmatpush1.msra.mxu0 0.0
    %1021 = vmatprep.subr.mxu0 0.0
    %1022 = vmatpush1.msra.mxu0 0.0
    %1023 = vmatprep.subr.mxu0 0.0
    %1024 = vmatpush1.msra.mxu0 0.0
    %1025 = vmatprep.subr.mxu0 0.0
    %1026 = vmatpush1.msra.mxu0 0.0
    %1027 = vmatprep.subr.mxu0 0.0
    %1028 = vmatpush1.msra.mxu0 0.0
    %1029 = vmatprep.subr.mxu0 0.0
    %1030 = vmatpush1.msra.mxu0 0.0
    %1031 = vmatprep.subr.mxu0 0.0
    %1032 = vmatpush1.msra.mxu0 0.0
    %1033 = vmatprep.subr.mxu0 0.0
    %1034 = vmatpush1.msra.mxu0 0.0
    %1035 = vmatprep.subr.mxu0 0.0
    %1036 = vmatpush1.msra.mxu0 0.0
    %1037 = vmatprep.subr.mxu0 0.0
    %1038 = vmatpush1.msra.mxu0 0.0
    %1039 = vmatprep.subr.mxu0 0.0
    %1040 = vmatpush1.msra.mxu0 0.0
    %1041 = vmatprep.subr.mxu0 0.0
    %1042 = vmatpush1.msra.mxu0 0.0
    %1043 = vmatprep.subr.mxu0 0.0
    %1044 = vmatpush1.msra.mxu0 0.0
    %1045 = vmatprep.subr.mxu0 0.0
    %1046 = vmatpush1.msra.mxu0 0.0
    %1047 = vmatprep.subr.mxu0 0.0
    %1048 = vmatpush1.msra.mxu0 0.0
    %1049 = vmatprep.subr.mxu0 0.0
    %1050 = vmatpush1.msra.mxu0 0.0
    %1051 = vmatprep.mubr.f32.mxu0 0.0
    %1052 = vmatmul.mubr.f32.gmra.mrb[0].mxu0 %v985
    %v1053 = vpop.f32.mrb[0].mxu0
    %v1054 = vadd.f32 0.0, %v1053
    %v1055 = vpop.f32.mrb[0].mxu0
    %1056 = vdwg.mxu0
    %1057 = vrot.lane.b32.xlu0 %v158, 120
    %v1058 = vpop.permute.xlu0 %1057
    %1059 = vrot.lane.b32.xlu0 %v158, 88
    %v1060 = vpop.permute.xlu0 %1059
    %v1061 = vsel %vm164, %v1058, 0
    %v1063 = vsel %vm164, %v1060, 0
    %1065 = vmatprep.subr.mxu0 0.0
    %1066 = vmatpush1.xpose.msra.mxu0 %v1063
    %1067 = vmatprep.subr.mxu0 0.0
    %1068 = vmatpush1.xpose.msra.mxu0 0.0
    %1069 = vmatprep.subr.mxu0 0.0
    %1070 = vmatpush1.xpose.msra.mxu0 0.0
    %1071 = vmatprep.subr.mxu0 0.0
    %1072 = vmatpush1.xpose.msra.mxu0 0.0
    %1073 = vmatprep.subr.mxu0 0.0
    %1074 = vmatpush1.xpose.msra.mxu0 0.0
    %1075 = vmatprep.subr.mxu0 0.0
    %1076 = vmatpush1.xpose.msra.mxu0 0.0
    %1077 = vmatprep.subr.mxu0 0.0
    %1078 = vmatpush1.xpose.msra.mxu0 0.0
    %1079 = vmatprep.subr.mxu0 0.0
    %1080 = vmatpush1.xpose.msra.mxu0 0.0
    %1081 = vmatprep.subr.mxu0 0.0
    %1082 = vmatpush1.xpose.msra.mxu0 0.0
    %1083 = vmatprep.subr.mxu0 0.0
    %1084 = vmatpush1.xpose.msra.mxu0 0.0
    %1085 = vmatprep.subr.mxu0 0.0
    %1086 = vmatpush1.xpose.msra.mxu0 0.0
    %1087 = vmatprep.subr.mxu0 0.0
    %1088 = vmatpush1.xpose.msra.mxu0 0.0
    %1089 = vmatprep.subr.mxu0 0.0
    %1090 = vmatpush1.xpose.msra.mxu0 0.0
    %1091 = vmatprep.subr.mxu0 0.0
    %1092 = vmatpush1.xpose.msra.mxu0 0.0
    %1093 = vmatprep.subr.mxu0 0.0
    %1094 = vmatpush1.xpose.msra.mxu0 0.0
    %1095 = vmatprep.subr.mxu0 0.0
    %1096 = vmatpush1.xpose.msra.mxu0 0.0
    %1097 = vmatprep.subr.mxu0 0.0
    %1098 = vmatpush1.xpose.msra.mxu0 0.0
    %1099 = vmatprep.subr.mxu0 0.0
    %1100 = vmatpush1.xpose.msra.mxu0 0.0
    %1101 = vmatprep.subr.mxu0 0.0
    %1102 = vmatpush1.xpose.msra.mxu0 0.0
    %1103 = vmatprep.subr.mxu0 0.0
    %1104 = vmatpush1.xpose.msra.mxu0 0.0
    %1105 = vmatprep.subr.mxu0 0.0
    %1106 = vmatpush1.xpose.msra.mxu0 0.0
    %1107 = vmatprep.subr.mxu0 0.0
    %1108 = vmatpush1.xpose.msra.mxu0 0.0
    %1109 = vmatprep.subr.mxu0 0.0
    %1110 = vmatpush1.xpose.msra.mxu0 0.0
    %1111 = vmatprep.subr.mxu0 0.0
    %1112 = vmatpush1.xpose.msra.mxu0 0.0
    %1113 = vmatprep.subr.mxu0 0.0
    %1114 = vmatpush1.xpose.msra.mxu0 0.0
    %1115 = vmatprep.subr.mxu0 0.0
    %1116 = vmatpush1.xpose.msra.mxu0 0.0
    %1117 = vmatprep.subr.mxu0 0.0
    %1118 = vmatpush1.xpose.msra.mxu0 0.0
    %1119 = vmatprep.subr.mxu0 0.0
    %1120 = vmatpush1.xpose.msra.mxu0 0.0
    %1121 = vmatprep.subr.mxu0 0.0
    %1122 = vmatpush1.xpose.msra.mxu0 0.0
    %1123 = vmatprep.subr.mxu0 0.0
    %1124 = vmatpush1.xpose.msra.mxu0 0.0
    %1125 = vmatprep.subr.mxu0 0.0
    %1126 = vmatpush1.xpose.msra.mxu0 0.0
    %1127 = vmatprep.subr.mxu0 0.0
    %1128 = vmatpush1.xpose.msra.mxu0 0.0
    %1129 = vmatprep.mubr.f32.mxu0 0.0
    %1130 = vmatmul.mubr.f32.gmra.mrb[0].mxu0 %v1061
    %v1131 = vpop.f32.mrb[0].mxu0
    %v1132 = vadd.f32 0.0, %v1131
    %v1133 = vpop.f32.mrb[0].mxu0
    %1134 = vdwg.mxu0
    %v1135 = vmul.f32 %v1132, 0.35355338
    %v1136 = vsel %vm164, %v1135, -inf
    %1137 = vmax.xlane.f32.xlu0 %v1136
    %v1138 = vpop.xlane.xlu0 %1137
    %v1139 = vsub.f32 %v1135, %v1138
    %v1140 = vmul.f32 %v1139, 1.442695
    %v1141 = vpow.pop %v1140
    %v1142 = vsel %vm164, %v1141, 0.0
    %1143 = vadd.xlane.f32.xlu0 %v1142
    %v1144 = vpop.xlane.xlu0 %1143
    %v1145 = vrcp.pop %v1144
    %v1146 = vmul.f32 %v1141, %v1145
    %1147 = vrot.lane.b32.xlu0 %v158, 56
    %v1148 = vpop.permute.xlu0 %1147
    %v1151 = vsel %vm164, %v1146, 0
    %1153 = vmatprep.subr.mxu0 0.0
    %1154 = vmatpush1.msra.mxu0 %v1148
    %1155 = vmatprep.subr.mxu0 0.0
    %1156 = vmatpush1.msra.mxu0 0.0
    %1157 = vmatprep.subr.mxu0 0.0
    %1158 = vmatpush1.msra.mxu0 0.0
    %1159 = vmatprep.subr.mxu0 0.0
    %1160 = vmatpush1.msra.mxu0 0.0
    %1161 = vmatprep.subr.mxu0 0.0
    %1162 = vmatpush1.msra.mxu0 0.0
    %1163 = vmatprep.subr.mxu0 0.0
    %1164 = vmatpush1.msra.mxu0 0.0
    %1165 = vmatprep.subr.mxu0 0.0
    %1166 = vmatpush1.msra.mxu0 0.0
    %1167 = vmatprep.subr.mxu0 0.0
    %1168 = vmatpush1.msra.mxu0 0.0
    %1169 = vmatprep.subr.mxu0 0.0
    %1170 = vmatpush1.msra.mxu0 0.0
    %1171 = vmatprep.subr.mxu0 0.0
    %1172 = vmatpush1.msra.mxu0 0.0
    %1173 = vmatprep.subr.mxu0 0.0
    %1174 = vmatpush1.msra.mxu0 0.0
    %1175 = vmatprep.subr.mxu0 0.0
    %1176 = vmatpush1.msra.mxu0 0.0
    %1177 = vmatprep.subr.mxu0 0.0
    %1178 = vmatpush1.msra.mxu0 0.0
    %1179 = vmatprep.subr.mxu0 0.0
    %1180 = vmatpush1.msra.mxu0 0.0
    %1181 = vmatprep.subr.mxu0 0.0
    %1182 = vmatpush1.msra.mxu0 0.0
    %1183 = vmatprep.subr.mxu0 0.0
    %1184 = vmatpush1.msra.mxu0 0.0
    %1185 = vmatprep.subr.mxu0 0.0
    %1186 = vmatpush1.msra.mxu0 0.0
    %1187 = vmatprep.subr.mxu0 0.0
    %1188 = vmatpush1.msra.mxu0 0.0
    %1189 = vmatprep.subr.mxu0 0.0
    %1190 = vmatpush1.msra.mxu0 0.0
    %1191 = vmatprep.subr.mxu0 0.0
    %1192 = vmatpush1.msra.mxu0 0.0
    %1193 = vmatprep.subr.mxu0 0.0
    %1194 = vmatpush1.msra.mxu0 0.0
    %1195 = vmatprep.subr.mxu0 0.0
    %1196 = vmatpush1.msra.mxu0 0.0
    %1197 = vmatprep.subr.mxu0 0.0
    %1198 = vmatpush1.msra.mxu0 0.0
    %1199 = vmatprep.subr.mxu0 0.0
    %1200 = vmatpush1.msra.mxu0 0.0
    %1201 = vmatprep.subr.mxu0 0.0
    %1202 = vmatpush1.msra.mxu0 0.0
    %1203 = vmatprep.subr.mxu0 0.0
    %1204 = vmatpush1.msra.mxu0 0.0
    %1205 = vmatprep.subr.mxu0 0.0
    %1206 = vmatpush1.msra.mxu0 0.0
    %1207 = vmatprep.subr.mxu0 0.0
    %1208 = vmatpush1.msra.mxu0 0.0
    %1209 = vmatprep.subr.mxu0 0.0
    %1210 = vmatpush1.msra.mxu0 0.0
    %1211 = vmatprep.subr.mxu0 0.0
    %1212 = vmatpush1.msra.mxu0 0.0
    %1213 = vmatprep.subr.mxu0 0.0
    %1214 = vmatpush1.msra.mxu0 0.0
    %1215 = vmatprep.subr.mxu0 0.0
    %1216 = vmatpush1.msra.mxu0 0.0
    %1217 = vmatprep.mubr.f32.mxu0 0.0
    %1218 = vmatmul.mubr.f32.gmra.mrb[0].mxu0 %v1151
    %v1219 = vpop.f32.mrb[0].mxu0
    %v1220 = vadd.f32 0.0, %v1219
    %v1221 = vpop.f32.mrb[0].mxu0
    %1222 = vdwg.mxu0
    %1223 = vrot.lane.b32.xlu0 %v158, 112
    %v1224 = vpop.permute.xlu0 %1223
    %1225 = vrot.lane.b32.xlu0 %v158, 80
    %v1226 = vpop.permute.xlu0 %1225
    %v1227 = vsel %vm164, %v1224, 0
    %v1229 = vsel %vm164, %v1226, 0
    %1231 = vmatprep.subr.mxu0 0.0
    %1232 = vmatpush1.xpose.msra.mxu0 %v1229
    %1233 = vmatprep.subr.mxu0 0.0
    %1234 = vmatpush1.xpose.msra.mxu0 0.0
    %1235 = vmatprep.subr.mxu0 0.0
    %1236 = vmatpush1.xpose.msra.mxu0 0.0
    %1237 = vmatprep.subr.mxu0 0.0
    %1238 = vmatpush1.xpose.msra.mxu0 0.0
    %1239 = vmatprep.subr.mxu0 0.0
    %1240 = vmatpush1.xpose.msra.mxu0 0.0
    %1241 = vmatprep.subr.mxu0 0.0
    %1242 = vmatpush1.xpose.msra.mxu0 0.0
    %1243 = vmatprep.subr.mxu0 0.0
    %1244 = vmatpush1.xpose.msra.mxu0 0.0
    %1245 = vmatprep.subr.mxu0 0.0
    %1246 = vmatpush1.xpose.msra.mxu0 0.0
    %1247 = vmatprep.subr.mxu0 0.0
    %1248 = vmatpush1.xpose.msra.mxu0 0.0
    %1249 = vmatprep.subr.mxu0 0.0
    %1250 = vmatpush1.xpose.msra.mxu0 0.0
    %1251 = vmatprep.subr.mxu0 0.0
    %1252 = vmatpush1.xpose.msra.mxu0 0.0
    %1253 = vmatprep.subr.mxu0 0.0
    %1254 = vmatpush1.xpose.msra.mxu0 0.0
    %1255 = vmatprep.subr.mxu0 0.0
    %1256 = vmatpush1.xpose.msra.mxu0 0.0
    %1257 = vmatprep.subr.mxu0 0.0
    %1258 = vmatpush1.xpose.msra.mxu0 0.0
    %1259 = vmatprep.subr.mxu0 0.0
    %1260 = vmatpush1.xpose.msra.mxu0 0.0
    %1261 = vmatprep.subr.mxu0 0.0
    %1262 = vmatpush1.xpose.msra.mxu0 0.0
    %1263 = vmatprep.subr.mxu0 0.0
    %1264 = vmatpush1.xpose.msra.mxu0 0.0
    %1265 = vmatprep.subr.mxu0 0.0
    %1266 = vmatpush1.xpose.msra.mxu0 0.0
    %1267 = vmatprep.subr.mxu0 0.0
    %1268 = vmatpush1.xpose.msra.mxu0 0.0
    %1269 = vmatprep.subr.mxu0 0.0
    %1270 = vmatpush1.xpose.msra.mxu0 0.0
    %1271 = vmatprep.subr.mxu0 0.0
    %1272 = vmatpush1.xpose.msra.mxu0 0.0
    %1273 = vmatprep.subr.mxu0 0.0
    %1274 = vmatpush1.xpose.msra.mxu0 0.0
    %1275 = vmatprep.subr.mxu0 0.0
    %1276 = vmatpush1.xpose.msra.mxu0 0.0
    %1277 = vmatprep.subr.mxu0 0.0
    %1278 = vmatpush1.xpose.msra.mxu0 0.0
    %1279 = vmatprep.subr.mxu0 0.0
    %1280 = vmatpush1.xpose.msra.mxu0 0.0
    %1281 = vmatprep.subr.mxu0 0.0
    %1282 = vmatpush1.xpose.msra.mxu0 0.0
    %1283 = vmatprep.subr.mxu0 0.0
    %1284 = vmatpush1.xpose.msra.mxu0 0.0
    %1285 = vmatprep.subr.mxu0 0.0
    %1286 = vmatpush1.xpose.msra.mxu0 0.0
    %1287 = vmatprep.subr.mxu0 0.0
    %1288 = vmatpush1.xpose.msra.mxu0 0.0
    %1289 = vmatprep.subr.mxu0 0.0
    %1290 = vmatpush1.xpose.msra.mxu0 0.0
    %1291 = vmatprep.subr.mxu0 0.0
    %1292 = vmatpush1.xpose.msra.mxu0 0.0
    %1293 = vmatprep.subr.mxu0 0.0
    %1294 = vmatpush1.xpose.msra.mxu0 0.0
    %1295 = vmatprep.mubr.f32.mxu0 0.0
    %1296 = vmatmul.mubr.f32.gmra.mrb[0].mxu0 %v1227
    %v1297 = vpop.f32.mrb[0].mxu0
    %v1298 = vadd.f32 0.0, %v1297
    %v1299 = vpop.f32.mrb[0].mxu0
    %1300 = vdwg.mxu0
    %v1301 = vmul.f32 %v1298, 0.35355338
    %v1302 = vsel %vm164, %v1301, -inf
    %1303 = vmax.xlane.f32.xlu0 %v1302
    %v1304 = vpop.xlane.xlu0 %1303
    %v1305 = vsub.f32 %v1301, %v1304
    %v1306 = vmul.f32 %v1305, 1.442695
    %v1307 = vpow.pop %v1306
    %v1308 = vsel %vm164, %v1307, 0.0
    %1309 = vadd.xlane.f32.xlu0 %v1308
    %v1310 = vpop.xlane.xlu0 %1309
    %v1311 = vrcp.pop %v1310
    %v1312 = vmul.f32 %v1307, %v1311
    %1313 = vrot.lane.b32.xlu0 %v158, 48
    %v1314 = vpop.permute.xlu0 %1313
    %v1317 = vsel %vm164, %v1312, 0
    %1319 = vmatprep.subr.mxu0 0.0
    %1320 = vmatpush1.msra.mxu0 %v1314
    %1321 = vmatprep.subr.mxu0 0.0
    %1322 = vmatpush1.msra.mxu0 0.0
    %1323 = vmatprep.subr.mxu0 0.0
    %1324 = vmatpush1.msra.mxu0 0.0
    %1325 = vmatprep.subr.mxu0 0.0
    %1326 = vmatpush1.msra.mxu0 0.0
    %1327 = vmatprep.subr.mxu0 0.0
    %1328 = vmatpush1.msra.mxu0 0.0
    %1329 = vmatprep.subr.mxu0 0.0
    %1330 = vmatpush1.msra.mxu0 0.0
    %1331 = vmatprep.subr.mxu0 0.0
    %1332 = vmatpush1.msra.mxu0 0.0
    %1333 = vmatprep.subr.mxu0 0.0
    %1334 = vmatpush1.msra.mxu0 0.0
    %1335 = vmatprep.subr.mxu0 0.0
    %1336 = vmatpush1.msra.mxu0 0.0
    %1337 = vmatprep.subr.mxu0 0.0
    %1338 = vmatpush1.msra.mxu0 0.0
    %1339 = vmatprep.subr.mxu0 0.0
    %1340 = vmatpush1.msra.mxu0 0.0
    %1341 = vmatprep.subr.mxu0 0.0
    %1342 = vmatpush1.msra.mxu0 0.0
    %1343 = vmatprep.subr.mxu0 0.0
    %1344 = vmatpush1.msra.mxu0 0.0
    %1345 = vmatprep.subr.mxu0 0.0
    %1346 = vmatpush1.msra.mxu0 0.0
    %1347 = vmatprep.subr.mxu0 0.0
    %1348 = vmatpush1.msra.mxu0 0.0
    %1349 = vmatprep.subr.mxu0 0.0
    %1350 = vmatpush1.msra.mxu0 0.0
    %1351 = vmatprep.subr.mxu0 0.0
    %1352 = vmatpush1.msra.mxu0 0.0
    %1353 = vmatprep.subr.mxu0 0.0
    %1354 = vmatpush1.msra.mxu0 0.0
    %1355 = vmatprep.subr.mxu0 0.0
    %1356 = vmatpush1.msra.mxu0 0.0
    %1357 = vmatprep.subr.mxu0 0.0
    %1358 = vmatpush1.msra.mxu0 0.0
    %1359 = vmatprep.subr.mxu0 0.0
    %1360 = vmatpush1.msra.mxu0 0.0
    %1361 = vmatprep.subr.mxu0 0.0
    %1362 = vmatpush1.msra.mxu0 0.0
    %1363 = vmatprep.subr.mxu0 0.0
    %1364 = vmatpush1.msra.mxu0 0.0
    %1365 = vmatprep.subr.mxu0 0.0
    %1366 = vmatpush1.msra.mxu0 0.0
    %1367 = vmatprep.subr.mxu0 0.0
    %1368 = vmatpush1.msra.mxu0 0.0
    %1369 = vmatprep.subr.mxu0 0.0
    %1370 = vmatpush1.msra.mxu0 0.0
    %1371 = vmatprep.subr.mxu0 0.0
    %1372 = vmatpush1.msra.mxu0 0.0
    %1373 = vmatprep.subr.mxu0 0.0
    %1374 = vmatpush1.msra.mxu0 0.0
    %1375 = vmatprep.subr.mxu0 0.0
    %1376 = vmatpush1.msra.mxu0 0.0
    %1377 = vmatprep.subr.mxu0 0.0
    %1378 = vmatpush1.msra.mxu0 0.0
    %1379 = vmatprep.subr.mxu0 0.0
    %1380 = vmatpush1.msra.mxu0 0.0
    %1381 = vmatprep.subr.mxu0 0.0
    %1382 = vmatpush1.msra.mxu0 0.0
    %1383 = vmatprep.mubr.f32.mxu0 0.0
    %1384 = vmatmul.mubr.f32.gmra.mrb[0].mxu0 %v1317
    %v1385 = vpop.f32.mrb[0].mxu0
    %v1386 = vadd.f32 0.0, %v1385
    %v1387 = vpop.f32.mrb[0].mxu0
    %1388 = vdwg.mxu0
    %1389 = vrot.lane.b32.xlu0 %v158, 104
    %v1390 = vpop.permute.xlu0 %1389
    %1391 = vrot.lane.b32.xlu0 %v158, 72
    %v1392 = vpop.permute.xlu0 %1391
    %v1393 = vsel %vm164, %v1390, 0
    %v1395 = vsel %vm164, %v1392, 0
    %1397 = vmatprep.subr.mxu0 0.0
    %1398 = vmatpush1.xpose.msra.mxu0 %v1395
    %1399 = vmatprep.subr.mxu0 0.0
    %1400 = vmatpush1.xpose.msra.mxu0 0.0
    %1401 = vmatprep.subr.mxu0 0.0
    %1402 = vmatpush1.xpose.msra.mxu0 0.0
    %1403 = vmatprep.subr.mxu0 0.0
    %1404 = vmatpush1.xpose.msra.mxu0 0.0
    %1405 = vmatprep.subr.mxu0 0.0
    %1406 = vmatpush1.xpose.msra.mxu0 0.0
    %1407 = vmatprep.subr.mxu0 0.0
    %1408 = vmatpush1.xpose.msra.mxu0 0.0
    %1409 = vmatprep.subr.mxu0 0.0
    %1410 = vmatpush1.xpose.msra.mxu0 0.0
    %1411 = vmatprep.subr.mxu0 0.0
    %1412 = vmatpush1.xpose.msra.mxu0 0.0
    %1413 = vmatprep.subr.mxu0 0.0
    %1414 = vmatpush1.xpose.msra.mxu0 0.0
    %1415 = vmatprep.subr.mxu0 0.0
    %1416 = vmatpush1.xpose.msra.mxu0 0.0
    %1417 = vmatprep.subr.mxu0 0.0
    %1418 = vmatpush1.xpose.msra.mxu0 0.0
    %1419 = vmatprep.subr.mxu0 0.0
    %1420 = vmatpush1.xpose.msra.mxu0 0.0
    %1421 = vmatprep.subr.mxu0 0.0
    %1422 = vmatpush1.xpose.msra.mxu0 0.0
    %1423 = vmatprep.subr.mxu0 0.0
    %1424 = vmatpush1.xpose.msra.mxu0 0.0
    %1425 = vmatprep.subr.mxu0 0.0
    %1426 = vmatpush1.xpose.msra.mxu0 0.0
    %1427 = vmatprep.subr.mxu0 0.0
    %1428 = vmatpush1.xpose.msra.mxu0 0.0
    %1429 = vmatprep.subr.mxu0 0.0
    %1430 = vmatpush1.xpose.msra.mxu0 0.0
    %1431 = vmatprep.subr.mxu0 0.0
    %1432 = vmatpush1.xpose.msra.mxu0 0.0
    %1433 = vmatprep.subr.mxu0 0.0
    %1434 = vmatpush1.xpose.msra.mxu0 0.0
    %1435 = vmatprep.subr.mxu0 0.0
    %1436 = vmatpush1.xpose.msra.mxu0 0.0
    %1437 = vmatprep.subr.mxu0 0.0
    %1438 = vmatpush1.xpose.msra.mxu0 0.0
    %1439 = vmatprep.subr.mxu0 0.0
    %1440 = vmatpush1.xpose.msra.mxu0 0.0
    %1441 = vmatprep.subr.mxu0 0.0
    %1442 = vmatpush1.xpose.msra.mxu0 0.0
    %1443 = vmatprep.subr.mxu0 0.0
    %1444 = vmatpush1.xpose.msra.mxu0 0.0
    %1445 = vmatprep.subr.mxu0 0.0
    %1446 = vmatpush1.xpose.msra.mxu0 0.0
    %1447 = vmatprep.subr.mxu0 0.0
    %1448 = vmatpush1.xpose.msra.mxu0 0.0
    %1449 = vmatprep.subr.mxu0 0.0
    %1450 = vmatpush1.xpose.msra.mxu0 0.0
    %1451 = vmatprep.subr.mxu0 0.0
    %1452 = vmatpush1.xpose.msra.mxu0 0.0
    %1453 = vmatprep.subr.mxu0 0.0
    %1454 = vmatpush1.xpose.msra.mxu0 0.0
    %1455 = vmatprep.subr.mxu0 0.0
    %1456 = vmatpush1.xpose.msra.mxu0 0.0
    %1457 = vmatprep.subr.mxu0 0.0
    %1458 = vmatpush1.xpose.msra.mxu0 0.0
    %1459 = vmatprep.subr.mxu0 0.0
    %1460 = vmatpush1.xpose.msra.mxu0 0.0
    %1461 = vmatprep.mubr.f32.mxu0 0.0
    %1462 = vmatmul.mubr.f32.gmra.mrb[0].mxu0 %v1393
    %v1463 = vpop.f32.mrb[0].mxu0
    %v1464 = vadd.f32 0.0, %v1463
    %v1465 = vpop.f32.mrb[0].mxu0
    %1466 = vdwg.mxu0
    %v1467 = vmul.f32 %v1464, 0.35355338
    %v1468 = vsel %vm164, %v1467, -inf
    %1469 = vmax.xlane.f32.xlu0 %v1468
    %v1470 = vpop.xlane.xlu0 %1469
    %v1471 = vsub.f32 %v1467, %v1470
    %v1472 = vmul.f32 %v1471, 1.442695
    %v1473 = vpow.pop %v1472
    %v1474 = vsel %vm164, %v1473, 0.0
    %1475 = vadd.xlane.f32.xlu0 %v1474
    %v1476 = vpop.xlane.xlu0 %1475
    %v1477 = vrcp.pop %v1476
    %v1478 = vmul.f32 %v1473, %v1477
    %1479 = vrot.lane.b32.xlu0 %v158, 40
    %v1480 = vpop.permute.xlu0 %1479
    %v1483 = vsel %vm164, %v1478, 0
    %1485 = vmatprep.subr.mxu0 0.0
    %1486 = vmatpush1.msra.mxu0 %v1480
    %1487 = vmatprep.subr.mxu0 0.0
    %1488 = vmatpush1.msra.mxu0 0.0
    %1489 = vmatprep.subr.mxu0 0.0
    %1490 = vmatpush1.msra.mxu0 0.0
    %1491 = vmatprep.subr.mxu0 0.0
    %1492 = vmatpush1.msra.mxu0 0.0
    %1493 = vmatprep.subr.mxu0 0.0
    %1494 = vmatpush1.msra.mxu0 0.0
    %1495 = vmatprep.subr.mxu0 0.0
    %1496 = vmatpush1.msra.mxu0 0.0
    %1497 = vmatprep.subr.mxu0 0.0
    %1498 = vmatpush1.msra.mxu0 0.0
    %1499 = vmatprep.subr.mxu0 0.0
    %1500 = vmatpush1.msra.mxu0 0.0
    %1501 = vmatprep.subr.mxu0 0.0
    %1502 = vmatpush1.msra.mxu0 0.0
    %1503 = vmatprep.subr.mxu0 0.0
    %1504 = vmatpush1.msra.mxu0 0.0
    %1505 = vmatprep.subr.mxu0 0.0
    %1506 = vmatpush1.msra.mxu0 0.0
    %1507 = vmatprep.subr.mxu0 0.0
    %1508 = vmatpush1.msra.mxu0 0.0
    %1509 = vmatprep.subr.mxu0 0.0
    %1510 = vmatpush1.msra.mxu0 0.0
    %1511 = vmatprep.subr.mxu0 0.0
    %1512 = vmatpush1.msra.mxu0 0.0
    %1513 = vmatprep.subr.mxu0 0.0
    %1514 = vmatpush1.msra.mxu0 0.0
    %1515 = vmatprep.subr.mxu0 0.0
    %1516 = vmatpush1.msra.mxu0 0.0
    %1517 = vmatprep.subr.mxu0 0.0
    %1518 = vmatpush1.msra.mxu0 0.0
    %1519 = vmatprep.subr.mxu0 0.0
    %1520 = vmatpush1.msra.mxu0 0.0
    %1521 = vmatprep.subr.mxu0 0.0
    %1522 = vmatpush1.msra.mxu0 0.0
    %1523 = vmatprep.subr.mxu0 0.0
    %1524 = vmatpush1.msra.mxu0 0.0
    %1525 = vmatprep.subr.mxu0 0.0
    %1526 = vmatpush1.msra.mxu0 0.0
    %1527 = vmatprep.subr.mxu0 0.0
    %1528 = vmatpush1.msra.mxu0 0.0
    %1529 = vmatprep.subr.mxu0 0.0
    %1530 = vmatpush1.msra.mxu0 0.0
    %1531 = vmatprep.subr.mxu0 0.0
    %1532 = vmatpush1.msra.mxu0 0.0
    %1533 = vmatprep.subr.mxu0 0.0
    %1534 = vmatpush1.msra.mxu0 0.0
    %1535 = vmatprep.subr.mxu0 0.0
    %1536 = vmatpush1.msra.mxu0 0.0
    %1537 = vmatprep.subr.mxu0 0.0
    %1538 = vmatpush1.msra.mxu0 0.0
    %1539 = vmatprep.subr.mxu0 0.0
    %1540 = vmatpush1.msra.mxu0 0.0
    %1541 = vmatprep.subr.mxu0 0.0
    %1542 = vmatpush1.msra.mxu0 0.0
    %1543 = vmatprep.subr.mxu0 0.0
    %1544 = vmatpush1.msra.mxu0 0.0
    %1545 = vmatprep.subr.mxu0 0.0
    %1546 = vmatpush1.msra.mxu0 0.0
    %1547 = vmatprep.subr.mxu0 0.0
    %1548 = vmatpush1.msra.mxu0 0.0
    %1549 = vmatprep.mubr.f32.mxu0 0.0
    %1550 = vmatmul.mubr.f32.gmra.mrb[0].mxu0 %v1483
    %v1551 = vpop.f32.mrb[0].mxu0
    %v1552 = vadd.f32 0.0, %v1551
    %v1553 = vpop.f32.mrb[0].mxu0
    %1554 = vdwg.mxu0
    %1555 = vrot.lane.b32.xlu0 %v1146, 8
    %v1556 = vpop.permute.xlu0 %1555
    %1558 = vrot.lane.b32.xlu0 %v1312, 16
    %v1559 = vpop.permute.xlu0 %1558
    %1561 = vrot.lane.b32.xlu0 %v1478, 24
    %v1562 = vpop.permute.xlu0 %1561
    %v1564 = vsel %vm164, %v980, %v1556
    %v1565 = vsel %vm835, %v1564, %v1559
    %v1566 = vsel %vm837, %v1565, %v1562
    %1568 = vrot.lane.b32.xlu0 %v1220, 8
    %v1569 = vpop.permute.xlu0 %1568
    %1572 = vrot.lane.b32.xlu0 %v1386, 16
    %v1573 = vpop.permute.xlu0 %1572
    %1576 = vrot.lane.b32.xlu0 %v1552, 24
    %v1577 = vpop.permute.xlu0 %1576
    %v1579 = vsel %vm164, %v1054, %v1569
    %v1580 = vsel %vm835, %v1579, %v1573
    %v1581 = vsel %vm837, %v1580, %v1577
    %1583 = vrot.lane.b32.xlu0 %v1135, 1
    %v1584 = vpop.permute.xlu0 %1583
    %1587 = vrot.lane.b32.xlu0 %v1301, 2
    %v1588 = vpop.permute.xlu0 %1587
    %1591 = vrot.lane.b32.xlu0 %v1467, 3
    %v1592 = vpop.permute.xlu0 %1591
    %v1594 = vsel %vm866, %v969, %v1584
    %v1595 = vsel %vm868, %v1594, %v1588
    %v1596 = vsel %vm870, %v1595, %v1592
    %v1597 = vsel %vm872, %v1596, -inf
    %v1598 = vrot.slane %v1597, 4
    %v1599 = vmax.f32 %v1597, %v1598
    %v1600 = vrot.slane %v1599, 2
    %v1601 = vmax.f32 %v1599, %v1600
    %v1602 = vrot.slane %v1601, 1
    %v1603 = vmax.f32 %v1601, %v1602
    %v1604 = vsub.f32 %v1596, %v1603
    %v1605 = vmul.f32 %v1604, 1.442695
    %v1606 = vpow.pop %v1605
    %v1607 = vsel %vm872, %v1606, 0.0
    %v1608 = vrot.slane %v1607, 4
    %v1609 = vadd.f32 %v1607, %v1608
    %v1610 = vrot.slane %v1609, 2
    %v1611 = vadd.f32 %v1609, %v1610
    %v1612 = vrot.slane %v1611, 1
    %v1613 = vadd.f32 %v1611, %v1612
    %v1614 = vrcp.pop %v1613
    %v1615 = vmul.f32 %v1606, %v1614
    %1616 = vst.msk [vmem:[#allocation9] sm:$0xff] %vm79, %v838
    %1617 = vst.msk [vmem:[#allocation9 + $0x8] sm:$0xff] %vm79, %v1566
    %1618 = vst.msk [vmem:[%s7] sm:$0xff] %vm872, %v891
    %1619 = vst.msk [vmem:[%s7 + $0x8] sm:$0xff] %vm872, %v1615
    %v1620 = vld [vmem:[#allocation7] sm:$0xff]
    %v1621 = vld [vmem:[#allocation7 + $0x8] sm:$0xff]
    %v1622 = vld [vmem:[#allocation7 + $0x10] sm:$0xff]
    %v1623 = vld [vmem:[#allocation7 + $0x18] sm:$0xff]
    %v1624 = vld [vmem:[%s4] sm:$0x1]
    %v1626 = vlaneseq
    %v1627 = vshrl.u32 %v1626, 7
    %v1628 = vsub.s32 0, %v1627
    %v1629 = vrot.slane %v1624, %v1628
    %v1632 = vsel %vm79, %v853, 0
    %v1635 = vsel %vm79, %v1581, 0
    %1637 = vmatprep.subr.mxu0 0.0
    %1638 = vmatpush1.msra.mxu0 %v1620
    %1639 = vmatprep.subr.mxu0 0.0
    %1640 = vmatpush1.msra.mxu0 %v1621
    %1641 = vmatprep.subr.mxu0 0.0
    %1642 = vmatpush1.msra.mxu0 %v1622
    %1643 = vmatprep.subr.mxu0 0.0
    %1644 = vmatpush1.msra.mxu0 %v1623
    %1645 = vmatprep.subr.mxu0 0.0
    %1646 = vmatpush1.msra.mxu0 0.0
    %1647 = vmatprep.subr.mxu0 0.0
    %1648 = vmatpush1.msra.mxu0 0.0
    %1649 = vmatprep.subr.mxu0 0.0
    %1650 = vmatpush1.msra.mxu0 0.0
    %1651 = vmatprep.subr.mxu0 0.0
    %1652 = vmatpush1.msra.mxu0 0.0
    %1653 = vmatprep.subr.mxu0 0.0
    %1654 = vmatpush1.msra.mxu0 0.0
    %1655 = vmatprep.subr.mxu0 0.0
    %1656 = vmatpush1.msra.mxu0 0.0
    %1657 = vmatprep.subr.mxu0 0.0
    %1658 = vmatpush1.msra.mxu0 0.0
    %1659 = vmatprep.subr.mxu0 0.0
    %1660 = vmatpush1.msra.mxu0 0.0
    %1661 = vmatprep.subr.mxu0 0.0
    %1662 = vmatpush1.msra.mxu0 0.0
    %1663 = vmatprep.subr.mxu0 0.0
    %1664 = vmatpush1.msra.mxu0 0.0
    %1665 = vmatprep.subr.mxu0 0.0
    %1666 = vmatpush1.msra.mxu0 0.0
    %1667 = vmatprep.subr.mxu0 0.0
    %1668 = vmatpush1.msra.mxu0 0.0
    %1669 = vmatprep.subr.mxu0 0.0
    %1670 = vmatpush1.msra.mxu0 0.0
    %1671 = vmatprep.subr.mxu0 0.0
    %1672 = vmatpush1.msra.mxu0 0.0
    %1673 = vmatprep.subr.mxu0 0.0
    %1674 = vmatpush1.msra.mxu0 0.0
    %1675 = vmatprep.subr.mxu0 0.0
    %1676 = vmatpush1.msra.mxu0 0.0
    %1677 = vmatprep.subr.mxu0 0.0
    %1678 = vmatpush1.msra.mxu0 0.0
    %1679 = vmatprep.subr.mxu0 0.0
    %1680 = vmatpush1.msra.mxu0 0.0
    %1681 = vmatprep.subr.mxu0 0.0
    %1682 = vmatpush1.msra.mxu0 0.0
    %1683 = vmatprep.subr.mxu0 0.0
    %1684 = vmatpush1.msra.mxu0 0.0
    %1685 = vmatprep.subr.mxu0 0.0
    %1686 = vmatpush1.msra.mxu0 0.0
    %1687 = vmatprep.subr.mxu0 0.0
    %1688 = vmatpush1.msra.mxu0 0.0
    %1689 = vmatprep.subr.mxu0 0.0
    %1690 = vmatpush1.msra.mxu0 0.0
    %1691 = vmatprep.subr.mxu0 0.0
    %1692 = vmatpush1.msra.mxu0 0.0
    %1693 = vmatprep.subr.mxu0 0.0
    %1694 = vmatpush1.msra.mxu0 0.0
    %1695 = vmatprep.subr.mxu0 0.0
    %1696 = vmatpush1.msra.mxu0 0.0
    %1697 = vmatprep.subr.mxu0 0.0
    %1698 = vmatpush1.msra.mxu0 0.0
    %1699 = vmatprep.subr.mxu0 0.0
    %1700 = vmatpush1.msra.mxu0 0.0
    %1701 = vmatprep.mubr.f32.mxu0 0.0
    %1702 = vmatmul.mubr.f32.gmra.mrb[0].mxu0 %v1632
    %v1703 = vpop.f32.mrb[0].mxu0
    %v1704 = vadd.f32 %v1629, %v1703
    %v1705 = vpop.f32.mrb[0].mxu0
    %1706 = vmatprep.mubr.f32.mxu0 0.0
    %1707 = vmatmul.mubr.f32.gmra.mrb[0].mxu0 %v1635
    %v1708 = vpop.f32.mrb[0].mxu0
    %v1709 = vadd.f32 %v1629, %v1708
    %v1710 = vpop.f32.mrb[0].mxu0
    %1711 = vdwg.mxu0
    %1712 = vst.msk [vmem:[#allocation8] sm:$0xff] %vm79, %v1704
    %1713 = vst.msk [vmem:[#allocation8 + $0x8] sm:$0xff] %vm79, %v1709
    // Predicated region
    $region34: #{tpu_custom_call.1} parent=1 // pred_check
      _
    $region35: #{tpu_custom_call.1} parent=1 // pred_check_branch
      %1715 = sbr.rel (0) target = $region37
    $region36: #{tpu_custom_call.1} parent=1 // pred_region
      %s1717 = ssub.s32 256, 256
      %1718 = vsyncadd [#allocation4], %s1717
      %s1719 = sshll.u32 [#allocation8], 4
      %s1720 = int_to_ptr.vmem [resolvable:$true] %s1719
      %1725 = dma.vmem_to_hbm [thread:$0]  %s1720, 256, %s5, [#allocation4], 128, 128, 8
    $region37: #{tpu_custom_call.1} parent=1 // pred_fallthru
      _
    // Predicated region
    $region38: #{tpu_custom_call.1} parent=1 // pred_check
      _
    $region39: #{tpu_custom_call.1} parent=1 // pred_check_branch
      %1727 = sbr.rel (0) target = $region41
    $region40: #{tpu_custom_call.1} parent=1 // pred_region
      %s1729 = ssub.s32 256, 256
      %1730 = vsyncadd [#allocation10], %s1729
      %s1731 = sshll.u32 [#allocation9], 4
      %s1732 = int_to_ptr.vmem [resolvable:$true] %s1731
      %1737 = dma.vmem_to_hbm [thread:$0]  %s1732, 256, %s6, [#allocation10], 128, 128, 8
    $region41: #{tpu_custom_call.1} parent=1 // pred_fallthru
      _
    // Predicated region
    $region42: #{tpu_custom_call.1} parent=1 // pred_check
      _
    $region43: #{tpu_custom_call.1} parent=1 // pred_check_branch
      %1739 = sbr.rel (0) target = $region45
    $region44: #{tpu_custom_call.1} parent=1 // pred_region
      _
    $region45: #{tpu_custom_call.1} parent=1 // pred_fallthru
      _
    // Predicated region
    $region46: #{tpu_custom_call.1} parent=1 // pred_check
      _
    $region47: #{tpu_custom_call.1} parent=1 // pred_check_branch
      %1741 = sbr.rel (0) target = $region49
    $region48: #{tpu_custom_call.1} parent=1 // pred_region
      %1742 = dma.done [#allocation4], 256
    $region49: #{tpu_custom_call.1} parent=1 // pred_fallthru
      _
    // Predicated region
    $region50: #{tpu_custom_call.1} parent=1 // pred_check
      _
    $region51: #{tpu_custom_call.1} parent=1 // pred_check_branch
      %1744 = sbr.rel (0) target = $region53
    $region52: #{tpu_custom_call.1} parent=1 // pred_region
      %1745 = dma.done [#allocation10], 256
    $region53: #{tpu_custom_call.1} parent=1 // pred_fallthru
      _
    // Predicated region
    $region54: #{tpu_custom_call.1} parent=1 // pred_check
      _
    $region55: #{tpu_custom_call.1} parent=1 // pred_check_branch
      %1747 = sbr.rel (0) target = $region57
    $region56: #{tpu_custom_call.1} parent=1 // pred_region
      _
    $region57: #{tpu_custom_call.1} parent=1 // pred_fallthru
      _
    %1748 = vsyncpa [#allocation3], 1
    %1749 = vsyncpa [#allocation6], 1
    %1750 = vsyncpa [#allocation4], 1
    %1751 = vsyncpa [#allocation10], 1

</llo_original>
